<compile_context>
chip_gen: v7x
topology: tpu7x:2x2x1
jax: 0.10.0
libtpu: 0.0.40
codegen_flags: <defaults>
</compile_context>

<pallas_src>
import functools
import math

import jax
import jax.numpy as jnp
from jax.experimental import pallas as pl
from jax.experimental.pallas import tpu as pltpu

_FOLD_LANE_TARGET = 512   # cap on folded row width (lanes)
_FOLD_MAX = 16            # cap on fold factor: keeps the HIGHEST-precision MXU
                          # segmented reductions well below HBM roofline on v5e


def _round_up(a, b):
    return -(-a // b) * b


def _choose_fold(rows, t):
    """Fold factor g: g rows share one lane-dense folded row of width g*t."""
    if t >= 128:
        return 1  # input already (nearly) lane-dense; folding not worth it
    g = 128 // math.gcd(t, 128)                      # smallest g with (g*t) % 128 == 0
    g = min(g, max(1, _FOLD_LANE_TARGET // t), _FOLD_MAX, rows)
    while g > 1 and rows % g:                        # divisor of rows -> no pad copy
        g -= 1
    return g


def _vmem_budget_bytes():
    cap = 128 * 1024 * 1024
    try:
        cap = int(pltpu.get_tpu_info().vmem_capacity_bytes)
    except Exception:
        pass
    # Total pipelined working set: stay under every generation's default scoped
    # limit (16 MiB v5e, 32 MiB v6e/v7x) and <= 1/4 of physical VMEM (v7x: 64 MiB).
    return min(12 * 1024 * 1024, cap // 4)


def _choose_rows_block(rows_f, width, in_itemsize):
    """Row-block size over the folded rows, using the *padded* tile footprint."""
    align = {4: 8, 2: 16, 1: 32}.get(in_itemsize, 8)   # sublane tiling of the dtype
    if rows_f <= align:
        return rows_f                                   # full extent is always legal
    padded_width = _round_up(width, 128)                # VMEM stores (8,128) tiles
    # double-buffered native-dtype input + ~4 full-width f32 temporaries
    per_row = padded_width * (2 * in_itemsize + 4 * 4)
    blk = max(align, (_vmem_budget_bytes() // per_row) // align * align)
    # >= 2 grid steps so the single "parallel" axis can shard across v7x's 2 TCs
    blk = min(blk, _round_up(-(-rows_f // 2), align))
    if blk >= rows_f:
        return rows_f
    nb = -(-rows_f // blk)
    if nb % 2:  # prefer an even step count: balances the two TensorCores on v7x
        blk2 = _round_up(-(-rows_f // (nb + 1)), align)
        if blk2 >= align and (-(-rows_f // blk2)) % 2 == 0:
            blk = blk2
    return blk


def _logvar_kernel(x_ref, o_ref, *, g, t, inv_n, inv_nm1):
    # x_ref: (blk, g*t) in native dtype; each folded row holds g segments of t.
    x = x_ref[...].astype(jnp.float32)
    if g == 1:
        # Reduction axis is the full (lane-dense-enough, t >= 128) last dim.
        s = jnp.sum(x, axis=-1, keepdims=True)
        mean = s * inv_n
        d = x - mean
        sd = jnp.sum(d, axis=-1, keepdims=True)
        ss = jnp.sum(d * d, axis=-1, keepdims=True)
    else:
        gt = g * t
        hp = jax.lax.Precision.HIGHEST
        # 0/1 segment-indicator matrices, built in-kernel (cheap VPU work).
        lane = jax.lax.broadcasted_iota(jnp.int32, (gt, g), 0)
        seg = jax.lax.broadcasted_iota(jnp.int32, (gt, g), 1) * t
        S = ((lane >= seg) & (lane < seg + t)).astype(jnp.float32)        # (gt, g)
        seg_r = jax.lax.broadcasted_iota(jnp.int32, (g, gt), 0) * t
        lane_r = jax.lax.broadcasted_iota(jnp.int32, (g, gt), 1)
        S_T = ((lane_r >= seg_r) & (lane_r < seg_r + t)).astype(jnp.float32)  # (g, gt)
        # Segmented reductions on the (otherwise idle) MXU -- no in-kernel reshape.
        s = jnp.dot(x, S, preferred_element_type=jnp.float32, precision=hp)      # (blk, g)
        mean = s * inv_n
        mean_b = jnp.dot(mean, S_T, preferred_element_type=jnp.float32, precision=hp)  # (blk, gt)
        d = x - mean_b
        sd = jnp.dot(d, S, preferred_element_type=jnp.float32, precision=hp)     # (blk, g)
        ss = jnp.dot(d * d, S, preferred_element_type=jnp.float32, precision=hp) # (blk, g)
    # Shifted two-pass variance; exact regardless of rounding in the mean shift:
    #   var = (sum(d^2) - sum(d)^2 / n) / (n - 1),  d = x - mean
    var = (ss - sd * sd * inv_n) * inv_nm1
    var = jnp.clip(var, 1e-6, 1e6)
    o_ref[...] = jnp.log(var).astype(o_ref.dtype)


def log_var_layer(x, dim):
    """Pallas equivalent of LogVarLayer(dim)(x)."""
    orig_shape = x.shape
    ndim = x.ndim
    dim = dim % ndim
    t = orig_shape[dim]

    # Move the reduction axis last and flatten the rest into rows.
    # For the FBCNet case (dim == last) both ops are free (no HBM copy).
    xm = jnp.moveaxis(x, dim, -1)
    lead_shape = xm.shape[:-1]
    rows = math.prod(lead_shape) if lead_shape else 1

    # Lane fold: g original rows per folded row (g divides rows -> no pad copy).
    g = _choose_fold(rows, t)
    rows_f = rows // g
    width = g * t
    x2 = xm.reshape(rows_f, width)   # contiguous fold; metadata-only for dim==last

    in_itemsize = jnp.dtype(x.dtype).itemsize
    blk = _choose_rows_block(rows_f, width, in_itemsize)
    nb = pl.cdiv(rows_f, blk)

    inv_n = 1.0 / float(t)
    # T == 1 -> variance clamps to 1e-6 (torch would give NaN); documented divergence.
    inv_nm1 = 1.0 / float(t - 1) if t > 1 else 0.0
    kernel = functools.partial(_logvar_kernel, g=g, t=t, inv_n=inv_n, inv_nm1=inv_nm1)

    cost = pl.CostEstimate(
        flops=int(rows * t * (8 * g + 5)),          # incl. indicator matmuls
        transcendentals=int(rows),                  # one log per output element
        bytes_accessed=int(rows * t * in_itemsize + rows * in_itemsize),
    )

    out2 = pl.pallas_call(
        kernel,
        out_shape=jax.ShapeDtypeStruct((rows_f, g), x.dtype),
        grid=(nb,),
        in_specs=[pl.BlockSpec((blk, width), lambda i: (i, 0))],
        out_specs=pl.BlockSpec((blk, g), lambda i: (i, 0)),
        compiler_params=pltpu.CompilerParams(
            dimension_semantics=("parallel",),
            vmem_limit_bytes=32 * 1024 * 1024,
        ),
        cost_estimate=cost,
    )(x2)

    # Unfold and restore keepdim=True on `dim`.
    out = out2.reshape(*lead_shape, 1)
    out = jnp.moveaxis(out, -1, dim)
    return out


def _reference(x, dim):
    # Pure-JAX reference matching torch semantics (unbiased var, clamp, log).
    var = jnp.var(x.astype(jnp.float32), axis=dim, keepdims=True, ddof=1)
    return jnp.log(jnp.clip(var, 1e-6, 1e6)).astype(x.dtype)


if __name__ == "__main__":
    # FBCNet-style input: (batch, filterBand, channels, time); LogVarLayer(dim=3)
    key = jax.random.PRNGKey(0)
    B, F, C, T = 2, 4, 16, 16
    x = jax.random.normal(key, (B, F, C, T), dtype=jnp.float32)

    out = jax.block_until_ready(log_var_layer(x, 3))
    ref = _reference(x, 3)
    assert out.shape == (B, F, C, 1), out.shape
    assert jnp.allclose(out, ref, atol=2e-3, rtol=2e-3), float(
        jnp.max(jnp.abs(out - ref))
    )

    # Large common-mode offset: exercises the mean-shifted two-pass variance.
    x_off = x + 300.0
    out_off = jax.block_until_ready(log_var_layer(x_off, 3))
    ref_off = _reference(x_off, 3)
    assert jnp.allclose(out_off, ref_off, atol=2e-3, rtol=2e-3), float(
        jnp.max(jnp.abs(out_off - ref_off))
    )

    # Ragged rows (rows = 60: fold falls back to a divisor, last block partial).
    x_r = jax.random.normal(jax.random.PRNGKey(1), (2, 3, 10, 16), dtype=jnp.float32)
    out_r = jax.block_until_ready(log_var_layer(x_r, 3))
    ref_r = _reference(x_r, 3)
    assert out_r.shape == (2, 3, 10, 1), out_r.shape
    assert jnp.allclose(out_r, ref_r, atol=2e-3, rtol=2e-3), float(
        jnp.max(jnp.abs(out_r - ref_r))
    )

    # Interior reduction dim (wrapper moveaxis path).
    out_d2 = jax.block_until_ready(log_var_layer(x, 2))
    ref_d2 = _reference(x, 2)
    assert out_d2.shape == (B, F, 1, T), out_d2.shape
    assert jnp.allclose(out_d2, ref_d2, atol=2e-3, rtol=2e-3), float(
        jnp.max(jnp.abs(out_d2 - ref_d2))
    )

    print("KERNEL_OK")
</pallas_src>

<mosaic_0001>
module attributes {stable_mosaic.version = 11 : i64} {
  func.func @_logvar_kernel(%arg0: i32, %arg1: memref<8x128xf32, #tpu.memory_space<vmem>>, %arg2: memref<8x8xf32, #tpu.memory_space<vmem>>) attributes {dimension_semantics = [#tpu.dimension_semantics<parallel>], iteration_bounds = array<i64: 2>, scalar_prefetch = 0 : i64, scratch_operands = 0 : i64, tpu.core_type = #tpu.core_type<tc>, window_params = [{transform_indices = @transform_0, window_bounds = array<i64: 8, 128>}, {transform_indices = @transform_1, window_bounds = array<i64: 8, 8>}]} {
    %c0 = arith.constant 0 : index
    %c0_0 = arith.constant 0 : index
    %0 = vector.load %arg1[%c0, %c0_0] : memref<8x128xf32, #tpu.memory_space<vmem>>, vector<8x128xf32>
    %1 = tpu.iota {dimensions = array<i32: 0>} : vector<128x8xi32>
    %2 = tpu.iota {dimensions = array<i32: 1>} : vector<128x8xi32>
    %c16_i32 = arith.constant 16 : i32
    %3 = vector.broadcast %c16_i32 : i32 to vector<128x8xi32>
    %4 = arith.muli %2, %3 : vector<128x8xi32>
    %5 = arith.cmpi sge, %1, %4 : vector<128x8xi32>
    %c16_i32_1 = arith.constant 16 : i32
    %6 = vector.broadcast %c16_i32_1 : i32 to vector<128x8xi32>
    %7 = arith.addi %4, %6 : vector<128x8xi32>
    %8 = arith.cmpi slt, %1, %7 : vector<128x8xi32>
    %9 = arith.andi %5, %8 : vector<128x8xi1>
    %10 = arith.extui %9 : vector<128x8xi1> to vector<128x8xi32>
    %11 = arith.sitofp %10 : vector<128x8xi32> to vector<128x8xf32>
    %12 = tpu.iota {dimensions = array<i32: 0>} : vector<8x128xi32>
    %c16_i32_2 = arith.constant 16 : i32
    %13 = vector.broadcast %c16_i32_2 : i32 to vector<8x128xi32>
    %14 = arith.muli %12, %13 : vector<8x128xi32>
    %15 = tpu.iota {dimensions = array<i32: 1>} : vector<8x128xi32>
    %16 = arith.cmpi sge, %15, %14 : vector<8x128xi32>
    %c16_i32_3 = arith.constant 16 : i32
    %17 = vector.broadcast %c16_i32_3 : i32 to vector<8x128xi32>
    %18 = arith.addi %14, %17 : vector<8x128xi32>
    %19 = arith.cmpi slt, %15, %18 : vector<8x128xi32>
    %20 = arith.andi %16, %19 : vector<8x128xi1>
    %21 = arith.extui %20 : vector<8x128xi1> to vector<8x128xi32>
    %22 = arith.sitofp %21 : vector<8x128xi32> to vector<8x128xf32>
    %cst = arith.constant dense<0.000000e+00> : vector<8x8xf32>
    %23 = tpu.matmul %0, %11, %cst {dimension_numbers = #tpu.dot_dimension_numbers<[1], [0], [0], [1], [0, 0, 1, 1], [], []>, precision = #tpu.contract_precision<fp32>} : vector<8x128xf32>, vector<128x8xf32>, vector<8x8xf32> -> vector<8x8xf32>
    %cst_4 = arith.constant 6.250000e-02 : f32
    %24 = vector.broadcast %cst_4 : f32 to vector<8x8xf32>
    %25 = arith.mulf %23, %24 : vector<8x8xf32>
    %cst_5 = arith.constant dense<0.000000e+00> : vector<8x128xf32>
    %26 = tpu.matmul %25, %22, %cst_5 {dimension_numbers = #tpu.dot_dimension_numbers<[1], [0], [0], [1], [0, 0, 1, 1], [], []>, precision = #tpu.contract_precision<fp32>} : vector<8x8xf32>, vector<8x128xf32>, vector<8x128xf32> -> vector<8x128xf32>
    %27 = arith.subf %0, %26 : vector<8x128xf32>
    %cst_6 = arith.constant dense<0.000000e+00> : vector<8x8xf32>
    %28 = tpu.matmul %27, %11, %cst_6 {dimension_numbers = #tpu.dot_dimension_numbers<[1], [0], [0], [1], [0, 0, 1, 1], [], []>, precision = #tpu.contract_precision<fp32>} : vector<8x128xf32>, vector<128x8xf32>, vector<8x8xf32> -> vector<8x8xf32>
    %29 = arith.mulf %27, %27 : vector<8x128xf32>
    %cst_7 = arith.constant dense<0.000000e+00> : vector<8x8xf32>
    %30 = tpu.matmul %29, %11, %cst_7 {dimension_numbers = #tpu.dot_dimension_numbers<[1], [0], [0], [1], [0, 0, 1, 1], [], []>, precision = #tpu.contract_precision<fp32>} : vector<8x128xf32>, vector<128x8xf32>, vector<8x8xf32> -> vector<8x8xf32>
    %31 = arith.mulf %28, %28 : vector<8x8xf32>
    %cst_8 = arith.constant 6.250000e-02 : f32
    %32 = vector.broadcast %cst_8 : f32 to vector<8x8xf32>
    %33 = arith.mulf %31, %32 : vector<8x8xf32>
    %34 = arith.subf %30, %33 : vector<8x8xf32>
    %cst_9 = arith.constant 0.0666666701 : f32
    %35 = vector.broadcast %cst_9 : f32 to vector<8x8xf32>
    %36 = arith.mulf %34, %35 : vector<8x8xf32>
    %cst_10 = arith.constant 9.99999997E-7 : f32
    %cst_11 = arith.constant 1.000000e+06 : f32
    %37 = vector.broadcast %cst_10 : f32 to vector<8x8xf32>
    %38 = arith.maximumf %37, %36 : vector<8x8xf32>
    %39 = vector.broadcast %cst_11 : f32 to vector<8x8xf32>
    %40 = arith.minimumf %39, %38 : vector<8x8xf32>
    %41 = math.log %40 : vector<8x8xf32>
    %c0_12 = arith.constant 0 : index
    %c0_13 = arith.constant 0 : index
    %42 = vector.load %arg2[%c0_12, %c0_13] : memref<8x8xf32, #tpu.memory_space<vmem>>, vector<8x8xf32>
    tpu.vector_store %arg2[%c0_12, %c0_13], %41 {strides = array<i32>} : memref<8x8xf32, #tpu.memory_space<vmem>>, vector<8x8xf32>,
    return
  }
  func.func @transform_0(%arg0: i32) -> (i32, i32) {
    %c0_i32 = arith.constant 0 : i32
    %c0_i32_0 = arith.constant 0 : i32
    return %arg0, %c0_i32 : i32, i32
  }
  func.func @transform_1(%arg0: i32) -> (i32, i32) {
    %c0_i32 = arith.constant 0 : i32
    %c0_i32_0 = arith.constant 0 : i32
    return %arg0, %c0_i32 : i32, i32
  }
}

</mosaic_0001>

<llo_original>
// kernel: tpu_custom_call.1
$region0: #{tpu_custom_call.1}
  #allocation0 [shape = 'u32[]', space=smem, size = 0x4, offset = 0x4, fixed_abs, tag = 'smem constant byte address 0x4 - core index']
  #allocation1 [shape = 'u32[144,128]{1,0:T(1,128)}', space=vmem, size = 0x12000, scoped, tag = 'internal scratch']
  %s0 = inlined_call_operand.hbm [shape: f32[16,128], index: 0, kind: input, shape index: {}]
  %s1 = inlined_call_operand.vmem [shape: f32[16,8], index: 1, kind: output, shape index: {}]
  %s2 = sld [smem:[#allocation0]]
  $region41: #{tpu_custom_call.1} parent=0
    _
  %s4 = ssub.s32 1, %s2
  %s5 = scalar_select 0, %s4, %s2
  $region1: #{tpu_custom_call.1} parent=0
    #allocation2 [shape = 'u8[8192]{0}', space=vmem, size = 0x2000, scoped, tag = 'input window, operand 0']
    #allocation3 [shape = 's32[2]{0}', space=sflag, size = 0x8, scoped, tag = 'scoped memory for tpu_custom_call.1']
    %6 = vsyncpa [#allocation3], 0
    %s7 = scalar_lea.sflag [#allocation3], 1
    %8 = vsyncpa %s7, 0
    loop: start=0, step=1, limit=4
    $region2: #{tpu_custom_call.1} parent=1 // loop_pre_header
      _
    $region3: #{tpu_custom_call.1} parent=1 // loop_header
      %s10 = sphi 0, %s14
      %p11 = scmp.ge.s32.totalorder %s10, 4
      %s20 = sphi 0, %s22
      %s23 = sphi 0, %s20
      %s24 = sphi 0, %s23
      %s40 = sphi 0, %s24
      %s46 = sphi 0, %s48
      %s49 = sphi 0, %s46
      %s50 = sphi 0, %s49
      %s66 = sphi 0, %s50
    $region4: #{tpu_custom_call.1} parent=1 // loop_header_branch
      %13 = sbr.rel (%p11) target = $region8
    $region5: #{tpu_custom_call.1} parent=1 // loop_body
      %s15 = ssub.s32 %s10, 1
      %s16 = ssub.s32 %s10, 2
      %s17 = sadd.s32 %s10, 1
      %s18 = ssub.s32 %s10, %s17
      %p19 = scmp.eq.s32.totalorder %s18, 0
      %s21 = sadd.s32 %s20, 1
      %s22 = scalar_select %p19, %s20, %s21
      %p25 = pneg %p19
      %p26 = scmp.eq.s32.totalorder %s10, 1
      %p27 = por %p25, %p26
      %p28 = scmp.ne.s32.totalorder %s20, %s23
      %p29 = scmp.eq.s32.totalorder %s10, 0
      %p30 = por %p28, %p29
      %p31 = scmp.ne.s32.totalorder %s20, %s23
      %p32 = scmp.eq.s32.totalorder %s15, 1
      %p33 = por %p31, %p32
      %p34 = scmp.ne.s32.totalorder %s23, %s24
      %p35 = scmp.eq.s32.totalorder %s15, 0
      %p36 = por %p34, %p35
      %p37 = scmp.ne.s32.totalorder %s23, %s24
      %p38 = scmp.eq.s32.totalorder %s16, 1
      %p39 = por %p37, %p38
      %p41 = scmp.ne.s32.totalorder %s24, %s40
      %p42 = scmp.eq.s32.totalorder %s16, 0
      %p43 = por %p41, %p42
      %s44 = ssub.s32 %s10, %s17
      %p45 = scmp.eq.s32.totalorder %s44, 0
      %s47 = sadd.s32 %s46, 1
      %s48 = scalar_select %p45, %s46, %s47
      %p51 = pneg %p45
      %p52 = scmp.eq.s32.totalorder %s10, 1
      %p53 = por %p51, %p52
      %p54 = scmp.ne.s32.totalorder %s46, %s49
      %p55 = scmp.eq.s32.totalorder %s10, 0
      %p56 = por %p54, %p55
      %p57 = scmp.ne.s32.totalorder %s46, %s49
      %p58 = scmp.eq.s32.totalorder %s15, 1
      %p59 = por %p57, %p58
      %p60 = scmp.ne.s32.totalorder %s49, %s50
      %p61 = scmp.eq.s32.totalorder %s15, 0
      %p62 = por %p60, %p61
      %p63 = scmp.ne.s32.totalorder %s49, %s50
      %p64 = scmp.eq.s32.totalorder %s16, 1
      %p65 = por %p63, %p64
      %p67 = scmp.ne.s32.totalorder %s50, %s66
      %p68 = scmp.eq.s32.totalorder %s16, 0
      %p69 = por %p67, %p68
      %p70 = scmp.le.s32.totalorder 1, %s10
      %p71 = scmp.lt.s32.totalorder %s10, 3
      %p72 = pnand %p70, %p71
      %p73 = pneg %p72
      // Predicated region
      $region9: #{tpu_custom_call.1} parent=5 // pred_check
        _
      $region10: #{tpu_custom_call.1} parent=5 // pred_check_branch
        %75 = sbr.rel (%p72) target = $region12
      $region11: #{tpu_custom_call.1} parent=5 // pred_region
        %s76 = ssub.s32 %s10, 1
      $region12: #{tpu_custom_call.1} parent=5 // pred_fallthru
        _
      %p77 = scmp.lt.s32.totalorder %s10, 2
      // Predicated region
      $region13: #{tpu_custom_call.1} parent=5 // pred_check
        %p78 = pneg %p77
      $region14: #{tpu_custom_call.1} parent=5 // pred_check_branch
        %80 = sbr.rel (%p78) target = $region16
      $region15: #{tpu_custom_call.1} parent=5 // pred_region
        // Predicated region
        $region17: #{tpu_custom_call.1} parent=15 // pred_check
          %p81 = pneg %p30
        $region18: #{tpu_custom_call.1} parent=15 // pred_check_branch
          %83 = sbr.rel (%p81) target = $region20
        $region19: #{tpu_custom_call.1} parent=15 // pred_region
          %s84 = sand.u32 %s20, 1
          %s85 = scalar_lea.sflag [#allocation3], %s84
          %s86 = sand.u32 %s20, 1
          %s87 = smul.addr %s86, 8
          %s88 = scalar_lea.vmem [#allocation2], %s87
          %s90 = ssub.s32 128, 128
          %91 = vsyncadd %s85, %s90
          %s92 = smul.addr %s10, 128
          %s93 = scalar_lea.hbm %s0, %s92
          %s95 = sshll.u32 %s88, 4
          %s96 = int_to_ptr.vmem [resolvable:$true] %s95
          %98 = dma.hbm_to_vmem [thread:$0]  %s93, 128, %s96, %s85
        $region20: #{tpu_custom_call.1} parent=15 // pred_fallthru
          _
      $region16: #{tpu_custom_call.1} parent=5 // pred_fallthru
        _
      %p99 = scmp.le.s32.totalorder 1, %s10
      %p100 = scmp.lt.s32.totalorder %s10, 3
      %p101 = pnand %p99, %p100
      %p102 = pneg %p101
      // Predicated region
      $region21: #{tpu_custom_call.1} parent=5 // pred_check
        _
      $region22: #{tpu_custom_call.1} parent=5 // pred_check_branch
        %104 = sbr.rel (%p101) target = $region24
      $region23: #{tpu_custom_call.1} parent=5 // pred_region
        %s105 = ssub.s32 %s10, 1
        %s106 = sand.u32 %s23, 1
        %s107 = scalar_lea.sflag [#allocation3], %s106
        %s108 = sand.u32 %s23, 1
        %s109 = smul.addr %s108, 8
        %s110 = scalar_lea.vmem [#allocation2], %s109
        // Predicated region
        $region25: #{tpu_custom_call.1} parent=23 // pred_check
          %p111 = pneg %p36
        $region26: #{tpu_custom_call.1} parent=23 // pred_check_branch
          %113 = sbr.rel (%p111) target = $region28
        $region27: #{tpu_custom_call.1} parent=23 // pred_region
          %114 = dma.done %s107, 128
        $region28: #{tpu_custom_call.1} parent=23 // pred_fallthru
          _
        %s115 = sand.u32 %s23, 1
        %s116 = scalar_lea.sflag [#allocation3], %s115
        %s117 = sand.u32 %s23, 1
        %s118 = smul.addr %s117, 8
        %s119 = scalar_lea.vmem [#allocation2], %s118
        %p120 = pneg %p36
        %p121 = pneg %p33
        %p122 = pneg %p62
        %p123 = pneg %p59
        %p124 = scmp.lt.s32.totalorder %s15, 1
        %s125 = scalar_select %p124, %s15, 1
        %s126 = smul.addr %s125, 8
        %s127 = scalar_lea.vmem %s1, %s126
        %p128 = scmp.lt.s32.totalorder %s15, 1
        %s129 = scalar_select %p128, %s15, 1
        %s130 = smul.addr %s129, 8
        %s131 = scalar_lea.vmem %s1, %s130
        %v132 = vld [vmem:[%s110] sm:$0xff]
        %v133 = vlaneseq
        %v134 = vshrl.u32 %v133, 7
        %v135 = vadd.s32 %v134, 8
        %v136 = vadd.s32 %v134, 16
        %v137 = vadd.s32 %v134, 24
        %v138 = vadd.s32 %v134, 32
        %v139 = vadd.s32 %v134, 40
        %v140 = vadd.s32 %v134, 48
        %v141 = vadd.s32 %v134, 56
        %v142 = vadd.s32 %v134, 64
        %v143 = vadd.s32 %v134, 72
        %v144 = vadd.s32 %v134, 80
        %v145 = vadd.s32 %v134, 88
        %v146 = vadd.s32 %v134, 96
        %v147 = vadd.s32 %v134, 104
        %v148 = vadd.s32 %v134, 112
        %v149 = vadd.s32 %v134, 120
        %v150 = vlaneseq
        %v151 = vand.u32 %v150, 127
        %v152 = vmul.u32 %v151, 16
        %vm153 = vcmp.ge.s32.totalorder %v134, %v152
        %vm154 = vcmp.ge.s32.totalorder %v135, %v152
        %vm155 = vcmp.ge.s32.totalorder %v136, %v152
        %vm156 = vcmp.ge.s32.totalorder %v137, %v152
        %vm157 = vcmp.ge.s32.totalorder %v138, %v152
        %vm158 = vcmp.ge.s32.totalorder %v139, %v152
        %vm159 = vcmp.ge.s32.totalorder %v140, %v152
        %vm160 = vcmp.ge.s32.totalorder %v141, %v152
        %vm161 = vcmp.ge.s32.totalorder %v142, %v152
        %vm162 = vcmp.ge.s32.totalorder %v143, %v152
        %vm163 = vcmp.ge.s32.totalorder %v144, %v152
        %vm164 = vcmp.ge.s32.totalorder %v145, %v152
        %vm165 = vcmp.ge.s32.totalorder %v146, %v152
        %vm166 = vcmp.ge.s32.totalorder %v147, %v152
        %vm167 = vcmp.ge.s32.totalorder %v148, %v152
        %vm168 = vcmp.ge.s32.totalorder %v149, %v152
        %v169 = vadd.s32 %v152, 16
        %vm170 = vcmp.lt.s32.totalorder %v134, %v169
        %vm171 = vcmp.lt.s32.totalorder %v135, %v169
        %vm172 = vcmp.lt.s32.totalorder %v136, %v169
        %vm173 = vcmp.lt.s32.totalorder %v137, %v169
        %vm174 = vcmp.lt.s32.totalorder %v138, %v169
        %vm175 = vcmp.lt.s32.totalorder %v139, %v169
        %vm176 = vcmp.lt.s32.totalorder %v140, %v169
        %vm177 = vcmp.lt.s32.totalorder %v141, %v169
        %vm178 = vcmp.lt.s32.totalorder %v142, %v169
        %vm179 = vcmp.lt.s32.totalorder %v143, %v169
        %vm180 = vcmp.lt.s32.totalorder %v144, %v169
        %vm181 = vcmp.lt.s32.totalorder %v145, %v169
        %vm182 = vcmp.lt.s32.totalorder %v146, %v169
        %vm183 = vcmp.lt.s32.totalorder %v147, %v169
        %vm184 = vcmp.lt.s32.totalorder %v148, %v169
        %vm185 = vcmp.lt.s32.totalorder %v149, %v169
        %vm186 = vmand %vm153, %vm170
        %vm187 = vmand %vm154, %vm171
        %vm188 = vmand %vm155, %vm172
        %vm189 = vmand %vm156, %vm173
        %vm190 = vmand %vm157, %vm174
        %vm191 = vmand %vm158, %vm175
        %vm192 = vmand %vm159, %vm176
        %vm193 = vmand %vm160, %vm177
        %vm194 = vmand %vm161, %vm178
        %vm195 = vmand %vm162, %vm179
        %vm196 = vmand %vm163, %vm180
        %vm197 = vmand %vm164, %vm181
        %vm198 = vmand %vm165, %vm182
        %vm199 = vmand %vm166, %vm183
        %vm200 = vmand %vm167, %vm184
        %vm201 = vmand %vm168, %vm185
        %v202 = vsel %vm186, 1, 0
        %v203 = vsel %vm187, 1, 0
        %v204 = vsel %vm188, 1, 0
        %v205 = vsel %vm189, 1, 0
        %v206 = vsel %vm190, 1, 0
        %v207 = vsel %vm191, 1, 0
        %v208 = vsel %vm192, 1, 0
        %v209 = vsel %vm193, 1, 0
        %v210 = vsel %vm194, 1, 0
        %v211 = vsel %vm195, 1, 0
        %v212 = vsel %vm196, 1, 0
        %v213 = vsel %vm197, 1, 0
        %v214 = vsel %vm198, 1, 0
        %v215 = vsel %vm199, 1, 0
        %v216 = vsel %vm200, 1, 0
        %v217 = vsel %vm201, 1, 0
        %v218 = vcvt.s32.f32 %v202
        %v219 = vcvt.s32.f32 %v203
        %v220 = vcvt.s32.f32 %v204
        %v221 = vcvt.s32.f32 %v205
        %v222 = vcvt.s32.f32 %v206
        %v223 = vcvt.s32.f32 %v207
        %v224 = vcvt.s32.f32 %v208
        %v225 = vcvt.s32.f32 %v209
        %v226 = vcvt.s32.f32 %v210
        %v227 = vcvt.s32.f32 %v211
        %v228 = vcvt.s32.f32 %v212
        %v229 = vcvt.s32.f32 %v213
        %v230 = vcvt.s32.f32 %v214
        %v231 = vcvt.s32.f32 %v215
        %v232 = vcvt.s32.f32 %v216
        %v233 = vcvt.s32.f32 %v217
        %v234 = vmul.u32 %v134, 16
        %vm235 = vcmp.ge.s32.totalorder %v151, %v234
        %v236 = vadd.s32 %v234, 16
        %vm237 = vcmp.lt.s32.totalorder %v151, %v236
        %vm238 = vmand %vm235, %vm237
        %v239 = vsel %vm238, 1, 0
        %v240 = vcvt.s32.f32 %v239
        %241 = vmatprep.subr.mxu0 0.0
        %v242 = vand.u32 %v218, 4294901760
        %243 = vmatpush1.msra.mxu0 %v242
        %244 = vmatprep.subr.mxu0 0.0
        %v245 = vand.u32 %v219, 4294901760
        %246 = vmatpush1.msra.mxu0 %v245
        %247 = vmatprep.subr.mxu0 0.0
        %v248 = vand.u32 %v220, 4294901760
        %249 = vmatpush1.msra.mxu0 %v248
        %250 = vmatprep.subr.mxu0 0.0
        %v251 = vand.u32 %v221, 4294901760
        %252 = vmatpush1.msra.mxu0 %v251
        %253 = vmatprep.subr.mxu0 0.0
        %v254 = vand.u32 %v222, 4294901760
        %255 = vmatpush1.msra.mxu0 %v254
        %256 = vmatprep.subr.mxu0 0.0
        %v257 = vand.u32 %v223, 4294901760
        %258 = vmatpush1.msra.mxu0 %v257
        %259 = vmatprep.subr.mxu0 0.0
        %v260 = vand.u32 %v224, 4294901760
        %261 = vmatpush1.msra.mxu0 %v260
        %262 = vmatprep.subr.mxu0 0.0
        %v263 = vand.u32 %v225, 4294901760
        %264 = vmatpush1.msra.mxu0 %v263
        %265 = vmatprep.subr.mxu0 0.0
        %v266 = vand.u32 %v226, 4294901760
        %267 = vmatpush1.msra.mxu0 %v266
        %268 = vmatprep.subr.mxu0 0.0
        %v269 = vand.u32 %v227, 4294901760
        %270 = vmatpush1.msra.mxu0 %v269
        %271 = vmatprep.subr.mxu0 0.0
        %v272 = vand.u32 %v228, 4294901760
        %273 = vmatpush1.msra.mxu0 %v272
        %274 = vmatprep.subr.mxu0 0.0
        %v275 = vand.u32 %v229, 4294901760
        %276 = vmatpush1.msra.mxu0 %v275
        %277 = vmatprep.subr.mxu0 0.0
        %v278 = vand.u32 %v230, 4294901760
        %279 = vmatpush1.msra.mxu0 %v278
        %280 = vmatprep.subr.mxu0 0.0
        %v281 = vand.u32 %v231, 4294901760
        %282 = vmatpush1.msra.mxu0 %v281
        %283 = vmatprep.subr.mxu0 0.0
        %v284 = vand.u32 %v232, 4294901760
        %285 = vmatpush1.msra.mxu0 %v284
        %286 = vmatprep.subr.mxu0 0.0
        %v287 = vand.u32 %v233, 4294901760
        %288 = vmatpush1.msra.mxu0 %v287
        %289 = vmatprep.subr.mxu0 0.0
        %290 = vmatpush1.msra.mxu0 0.0
        %291 = vmatprep.subr.mxu0 0.0
        %292 = vmatpush1.msra.mxu0 0.0
        %293 = vmatprep.subr.mxu0 0.0
        %294 = vmatpush1.msra.mxu0 0.0
        %295 = vmatprep.subr.mxu0 0.0
        %296 = vmatpush1.msra.mxu0 0.0
        %297 = vmatprep.subr.mxu0 0.0
        %298 = vmatpush1.msra.mxu0 0.0
        %299 = vmatprep.subr.mxu0 0.0
        %300 = vmatpush1.msra.mxu0 0.0
        %301 = vmatprep.subr.mxu0 0.0
        %302 = vmatpush1.msra.mxu0 0.0
        %303 = vmatprep.subr.mxu0 0.0
        %304 = vmatpush1.msra.mxu0 0.0
        %305 = vmatprep.subr.mxu0 0.0
        %306 = vmatpush1.msra.mxu0 0.0
        %307 = vmatprep.subr.mxu0 0.0
        %308 = vmatpush1.msra.mxu0 0.0
        %309 = vmatprep.subr.mxu0 0.0
        %310 = vmatpush1.msra.mxu0 0.0
        %311 = vmatprep.subr.mxu0 0.0
        %312 = vmatpush1.msra.mxu0 0.0
        %313 = vmatprep.subr.mxu0 0.0
        %314 = vmatpush1.msra.mxu0 0.0
        %315 = vmatprep.subr.mxu0 0.0
        %316 = vmatpush1.msra.mxu0 0.0
        %317 = vmatprep.subr.mxu0 0.0
        %318 = vmatpush1.msra.mxu0 0.0
        %319 = vmatprep.subr.mxu0 0.0
        %320 = vmatpush1.msra.mxu0 0.0
        %321 = vmatprep.mubr.f32.mxu0 0.0
        %v322 = vand.u32 %v132, 4294901760
        %v323 = vsub.f32 %v132, %v322
        %v324 = vand.u32 %v323, 4294901760
        %v325 = vsub.f32 %v323, %v324
        %v326 = vand.u32 %v325, 4294901760
        %327 = vmatmul.mubr.f32.gmra.mrb[0].mxu0 %v326
        %v328 = vpop.f32.mrb[0].mxu0
        %v329 = vadd.f32 0.0, %v328
        %v330 = vpop.f32.mrb[0].mxu0
        %331 = vdwg.mxu0
        %332 = vmatprep.subr.mxu0 0.0
        %v333 = vand.u32 %v218, 4294901760
        %v334 = vsub.f32 %v218, %v333
        %v335 = vand.u32 %v334, 4294901760
        %v336 = vsub.f32 %v334, %v335
        %v337 = vand.u32 %v336, 4294901760
        %338 = vmatpush1.msra.mxu0 %v337
        %339 = vmatprep.subr.mxu0 0.0
        %v340 = vand.u32 %v219, 4294901760
        %v341 = vsub.f32 %v219, %v340
        %v342 = vand.u32 %v341, 4294901760
        %v343 = vsub.f32 %v341, %v342
        %v344 = vand.u32 %v343, 4294901760
        %345 = vmatpush1.msra.mxu0 %v344
        %346 = vmatprep.subr.mxu0 0.0
        %v347 = vand.u32 %v220, 4294901760
        %v348 = vsub.f32 %v220, %v347
        %v349 = vand.u32 %v348, 4294901760
        %v350 = vsub.f32 %v348, %v349
        %v351 = vand.u32 %v350, 4294901760
        %352 = vmatpush1.msra.mxu0 %v351
        %353 = vmatprep.subr.mxu0 0.0
        %v354 = vand.u32 %v221, 4294901760
        %v355 = vsub.f32 %v221, %v354
        %v356 = vand.u32 %v355, 4294901760
        %v357 = vsub.f32 %v355, %v356
        %v358 = vand.u32 %v357, 4294901760
        %359 = vmatpush1.msra.mxu0 %v358
        %360 = vmatprep.subr.mxu0 0.0
        %v361 = vand.u32 %v222, 4294901760
        %v362 = vsub.f32 %v222, %v361
        %v363 = vand.u32 %v362, 4294901760
        %v364 = vsub.f32 %v362, %v363
        %v365 = vand.u32 %v364, 4294901760
        %366 = vmatpush1.msra.mxu0 %v365
        %367 = vmatprep.subr.mxu0 0.0
        %v368 = vand.u32 %v223, 4294901760
        %v369 = vsub.f32 %v223, %v368
        %v370 = vand.u32 %v369, 4294901760
        %v371 = vsub.f32 %v369, %v370
        %v372 = vand.u32 %v371, 4294901760
        %373 = vmatpush1.msra.mxu0 %v372
        %374 = vmatprep.subr.mxu0 0.0
        %v375 = vand.u32 %v224, 4294901760
        %v376 = vsub.f32 %v224, %v375
        %v377 = vand.u32 %v376, 4294901760
        %v378 = vsub.f32 %v376, %v377
        %v379 = vand.u32 %v378, 4294901760
        %380 = vmatpush1.msra.mxu0 %v379
        %381 = vmatprep.subr.mxu0 0.0
        %v382 = vand.u32 %v225, 4294901760
        %v383 = vsub.f32 %v225, %v382
        %v384 = vand.u32 %v383, 4294901760
        %v385 = vsub.f32 %v383, %v384
        %v386 = vand.u32 %v385, 4294901760
        %387 = vmatpush1.msra.mxu0 %v386
        %388 = vmatprep.subr.mxu0 0.0
        %v389 = vand.u32 %v226, 4294901760
        %v390 = vsub.f32 %v226, %v389
        %v391 = vand.u32 %v390, 4294901760
        %v392 = vsub.f32 %v390, %v391
        %v393 = vand.u32 %v392, 4294901760
        %394 = vmatpush1.msra.mxu0 %v393
        %395 = vmatprep.subr.mxu0 0.0
        %v396 = vand.u32 %v227, 4294901760
        %v397 = vsub.f32 %v227, %v396
        %v398 = vand.u32 %v397, 4294901760
        %v399 = vsub.f32 %v397, %v398
        %v400 = vand.u32 %v399, 4294901760
        %401 = vmatpush1.msra.mxu0 %v400
        %402 = vmatprep.subr.mxu0 0.0
        %v403 = vand.u32 %v228, 4294901760
        %v404 = vsub.f32 %v228, %v403
        %v405 = vand.u32 %v404, 4294901760
        %v406 = vsub.f32 %v404, %v405
        %v407 = vand.u32 %v406, 4294901760
        %408 = vmatpush1.msra.mxu0 %v407
        %409 = vmatprep.subr.mxu0 0.0
        %v410 = vand.u32 %v229, 4294901760
        %v411 = vsub.f32 %v229, %v410
        %v412 = vand.u32 %v411, 4294901760
        %v413 = vsub.f32 %v411, %v412
        %v414 = vand.u32 %v413, 4294901760
        %415 = vmatpush1.msra.mxu0 %v414
        %416 = vmatprep.subr.mxu0 0.0
        %v417 = vand.u32 %v230, 4294901760
        %v418 = vsub.f32 %v230, %v417
        %v419 = vand.u32 %v418, 4294901760
        %v420 = vsub.f32 %v418, %v419
        %v421 = vand.u32 %v420, 4294901760
        %422 = vmatpush1.msra.mxu0 %v421
        %423 = vmatprep.subr.mxu0 0.0
        %v424 = vand.u32 %v231, 4294901760
        %v425 = vsub.f32 %v231, %v424
        %v426 = vand.u32 %v425, 4294901760
        %v427 = vsub.f32 %v425, %v426
        %v428 = vand.u32 %v427, 4294901760
        %429 = vmatpush1.msra.mxu0 %v428
        %430 = vmatprep.subr.mxu0 0.0
        %v431 = vand.u32 %v232, 4294901760
        %v432 = vsub.f32 %v232, %v431
        %v433 = vand.u32 %v432, 4294901760
        %v434 = vsub.f32 %v432, %v433
        %v435 = vand.u32 %v434, 4294901760
        %436 = vmatpush1.msra.mxu0 %v435
        %437 = vmatprep.subr.mxu0 0.0
        %v438 = vand.u32 %v233, 4294901760
        %v439 = vsub.f32 %v233, %v438
        %v440 = vand.u32 %v439, 4294901760
        %v441 = vsub.f32 %v439, %v440
        %v442 = vand.u32 %v441, 4294901760
        %443 = vmatpush1.msra.mxu0 %v442
        %444 = vmatprep.subr.mxu0 0.0
        %445 = vmatpush1.msra.mxu0 0.0
        %446 = vmatprep.subr.mxu0 0.0
        %447 = vmatpush1.msra.mxu0 0.0
        %448 = vmatprep.subr.mxu0 0.0
        %449 = vmatpush1.msra.mxu0 0.0
        %450 = vmatprep.subr.mxu0 0.0
        %451 = vmatpush1.msra.mxu0 0.0
        %452 = vmatprep.subr.mxu0 0.0
        %453 = vmatpush1.msra.mxu0 0.0
        %454 = vmatprep.subr.mxu0 0.0
        %455 = vmatpush1.msra.mxu0 0.0
        %456 = vmatprep.subr.mxu0 0.0
        %457 = vmatpush1.msra.mxu0 0.0
        %458 = vmatprep.subr.mxu0 0.0
        %459 = vmatpush1.msra.mxu0 0.0
        %460 = vmatprep.subr.mxu0 0.0
        %461 = vmatpush1.msra.mxu0 0.0
        %462 = vmatprep.subr.mxu0 0.0
        %463 = vmatpush1.msra.mxu0 0.0
        %464 = vmatprep.subr.mxu0 0.0
        %465 = vmatpush1.msra.mxu0 0.0
        %466 = vmatprep.subr.mxu0 0.0
        %467 = vmatpush1.msra.mxu0 0.0
        %468 = vmatprep.subr.mxu0 0.0
        %469 = vmatpush1.msra.mxu0 0.0
        %470 = vmatprep.subr.mxu0 0.0
        %471 = vmatpush1.msra.mxu0 0.0
        %472 = vmatprep.subr.mxu0 0.0
        %473 = vmatpush1.msra.mxu0 0.0
        %474 = vmatprep.subr.mxu0 0.0
        %475 = vmatpush1.msra.mxu0 0.0
        %476 = vmatprep.mubr.f32.mxu0 0.0
        %v477 = vand.u32 %v132, 4294901760
        %478 = vmatmul.mubr.f32.gmra.mrb[0].mxu0 %v477
        %v479 = vpop.f32.mrb[0].mxu0
        %v480 = vadd.f32 %v329, %v479
        %v481 = vpop.f32.mrb[0].mxu0
        %482 = vdwg.mxu0
        %483 = vmatprep.subr.mxu0 0.0
        %v484 = vand.u32 %v218, 4294901760
        %v485 = vsub.f32 %v218, %v484
        %486 = vmatpush1.msra.mxu0 %v485
        %487 = vmatprep.subr.mxu0 0.0
        %v488 = vand.u32 %v219, 4294901760
        %v489 = vsub.f32 %v219, %v488
        %490 = vmatpush1.msra.mxu0 %v489
        %491 = vmatprep.subr.mxu0 0.0
        %v492 = vand.u32 %v220, 4294901760
        %v493 = vsub.f32 %v220, %v492
        %494 = vmatpush1.msra.mxu0 %v493
        %495 = vmatprep.subr.mxu0 0.0
        %v496 = vand.u32 %v221, 4294901760
        %v497 = vsub.f32 %v221, %v496
        %498 = vmatpush1.msra.mxu0 %v497
        %499 = vmatprep.subr.mxu0 0.0
        %v500 = vand.u32 %v222, 4294901760
        %v501 = vsub.f32 %v222, %v500
        %502 = vmatpush1.msra.mxu0 %v501
        %503 = vmatprep.subr.mxu0 0.0
        %v504 = vand.u32 %v223, 4294901760
        %v505 = vsub.f32 %v223, %v504
        %506 = vmatpush1.msra.mxu0 %v505
        %507 = vmatprep.subr.mxu0 0.0
        %v508 = vand.u32 %v224, 4294901760
        %v509 = vsub.f32 %v224, %v508
        %510 = vmatpush1.msra.mxu0 %v509
        %511 = vmatprep.subr.mxu0 0.0
        %v512 = vand.u32 %v225, 4294901760
        %v513 = vsub.f32 %v225, %v512
        %514 = vmatpush1.msra.mxu0 %v513
        %515 = vmatprep.subr.mxu0 0.0
        %v516 = vand.u32 %v226, 4294901760
        %v517 = vsub.f32 %v226, %v516
        %518 = vmatpush1.msra.mxu0 %v517
        %519 = vmatprep.subr.mxu0 0.0
        %v520 = vand.u32 %v227, 4294901760
        %v521 = vsub.f32 %v227, %v520
        %522 = vmatpush1.msra.mxu0 %v521
        %523 = vmatprep.subr.mxu0 0.0
        %v524 = vand.u32 %v228, 4294901760
        %v525 = vsub.f32 %v228, %v524
        %526 = vmatpush1.msra.mxu0 %v525
        %527 = vmatprep.subr.mxu0 0.0
        %v528 = vand.u32 %v229, 4294901760
        %v529 = vsub.f32 %v229, %v528
        %530 = vmatpush1.msra.mxu0 %v529
        %531 = vmatprep.subr.mxu0 0.0
        %v532 = vand.u32 %v230, 4294901760
        %v533 = vsub.f32 %v230, %v532
        %534 = vmatpush1.msra.mxu0 %v533
        %535 = vmatprep.subr.mxu0 0.0
        %v536 = vand.u32 %v231, 4294901760
        %v537 = vsub.f32 %v231, %v536
        %538 = vmatpush1.msra.mxu0 %v537
        %539 = vmatprep.subr.mxu0 0.0
        %v540 = vand.u32 %v232, 4294901760
        %v541 = vsub.f32 %v232, %v540
        %542 = vmatpush1.msra.mxu0 %v541
        %543 = vmatprep.subr.mxu0 0.0
        %v544 = vand.u32 %v233, 4294901760
        %v545 = vsub.f32 %v233, %v544
        %546 = vmatpush1.msra.mxu0 %v545
        %547 = vmatprep.subr.mxu0 0.0
        %548 = vmatpush1.msra.mxu0 0.0
        %549 = vmatprep.subr.mxu0 0.0
        %550 = vmatpush1.msra.mxu0 0.0
        %551 = vmatprep.subr.mxu0 0.0
        %552 = vmatpush1.msra.mxu0 0.0
        %553 = vmatprep.subr.mxu0 0.0
        %554 = vmatpush1.msra.mxu0 0.0
        %555 = vmatprep.subr.mxu0 0.0
        %556 = vmatpush1.msra.mxu0 0.0
        %557 = vmatprep.subr.mxu0 0.0
        %558 = vmatpush1.msra.mxu0 0.0
        %559 = vmatprep.subr.mxu0 0.0
        %560 = vmatpush1.msra.mxu0 0.0
        %561 = vmatprep.subr.mxu0 0.0
        %562 = vmatpush1.msra.mxu0 0.0
        %563 = vmatprep.subr.mxu0 0.0
        %564 = vmatpush1.msra.mxu0 0.0
        %565 = vmatprep.subr.mxu0 0.0
        %566 = vmatpush1.msra.mxu0 0.0
        %567 = vmatprep.subr.mxu0 0.0
        %568 = vmatpush1.msra.mxu0 0.0
        %569 = vmatprep.subr.mxu0 0.0
        %570 = vmatpush1.msra.mxu0 0.0
        %571 = vmatprep.subr.mxu0 0.0
        %572 = vmatpush1.msra.mxu0 0.0
        %573 = vmatprep.subr.mxu0 0.0
        %574 = vmatpush1.msra.mxu0 0.0
        %575 = vmatprep.subr.mxu0 0.0
        %576 = vmatpush1.msra.mxu0 0.0
        %577 = vmatprep.subr.mxu0 0.0
        %578 = vmatpush1.msra.mxu0 0.0
        %579 = vmatprep.mubr.f32.mxu0 0.0
        %v580 = vand.u32 %v132, 4294901760
        %v581 = vsub.f32 %v132, %v580
        %582 = vmatmul.mubr.f32.gmra.mrb[0].mxu0 %v581
        %v583 = vpop.f32.mrb[0].mxu0
        %v584 = vadd.f32 %v480, %v583
        %v585 = vpop.f32.mrb[0].mxu0
        %586 = vdwg.mxu0
        %587 = vmatprep.subr.mxu0 0.0
        %v588 = vand.u32 %v218, 4294901760
        %589 = vmatpush1.msra.mxu0 %v588
        %590 = vmatprep.subr.mxu0 0.0
        %v591 = vand.u32 %v219, 4294901760
        %592 = vmatpush1.msra.mxu0 %v591
        %593 = vmatprep.subr.mxu0 0.0
        %v594 = vand.u32 %v220, 4294901760
        %595 = vmatpush1.msra.mxu0 %v594
        %596 = vmatprep.subr.mxu0 0.0
        %v597 = vand.u32 %v221, 4294901760
        %598 = vmatpush1.msra.mxu0 %v597
        %599 = vmatprep.subr.mxu0 0.0
        %v600 = vand.u32 %v222, 4294901760
        %601 = vmatpush1.msra.mxu0 %v600
        %602 = vmatprep.subr.mxu0 0.0
        %v603 = vand.u32 %v223, 4294901760
        %604 = vmatpush1.msra.mxu0 %v603
        %605 = vmatprep.subr.mxu0 0.0
        %v606 = vand.u32 %v224, 4294901760
        %607 = vmatpush1.msra.mxu0 %v606
        %608 = vmatprep.subr.mxu0 0.0
        %v609 = vand.u32 %v225, 4294901760
        %610 = vmatpush1.msra.mxu0 %v609
        %611 = vmatprep.subr.mxu0 0.0
        %v612 = vand.u32 %v226, 4294901760
        %613 = vmatpush1.msra.mxu0 %v612
        %614 = vmatprep.subr.mxu0 0.0
        %v615 = vand.u32 %v227, 4294901760
        %616 = vmatpush1.msra.mxu0 %v615
        %617 = vmatprep.subr.mxu0 0.0
        %v618 = vand.u32 %v228, 4294901760
        %619 = vmatpush1.msra.mxu0 %v618
        %620 = vmatprep.subr.mxu0 0.0
        %v621 = vand.u32 %v229, 4294901760
        %622 = vmatpush1.msra.mxu0 %v621
        %623 = vmatprep.subr.mxu0 0.0
        %v624 = vand.u32 %v230, 4294901760
        %625 = vmatpush1.msra.mxu0 %v624
        %626 = vmatprep.subr.mxu0 0.0
        %v627 = vand.u32 %v231, 4294901760
        %628 = vmatpush1.msra.mxu0 %v627
        %629 = vmatprep.subr.mxu0 0.0
        %v630 = vand.u32 %v232, 4294901760
        %631 = vmatpush1.msra.mxu0 %v630
        %632 = vmatprep.subr.mxu0 0.0
        %v633 = vand.u32 %v233, 4294901760
        %634 = vmatpush1.msra.mxu0 %v633
        %635 = vmatprep.subr.mxu0 0.0
        %636 = vmatpush1.msra.mxu0 0.0
        %637 = vmatprep.subr.mxu0 0.0
        %638 = vmatpush1.msra.mxu0 0.0
        %639 = vmatprep.subr.mxu0 0.0
        %640 = vmatpush1.msra.mxu0 0.0
        %641 = vmatprep.subr.mxu0 0.0
        %642 = vmatpush1.msra.mxu0 0.0
        %643 = vmatprep.subr.mxu0 0.0
        %644 = vmatpush1.msra.mxu0 0.0
        %645 = vmatprep.subr.mxu0 0.0
        %646 = vmatpush1.msra.mxu0 0.0
        %647 = vmatprep.subr.mxu0 0.0
        %648 = vmatpush1.msra.mxu0 0.0
        %649 = vmatprep.subr.mxu0 0.0
        %650 = vmatpush1.msra.mxu0 0.0
        %651 = vmatprep.subr.mxu0 0.0
        %652 = vmatpush1.msra.mxu0 0.0
        %653 = vmatprep.subr.mxu0 0.0
        %654 = vmatpush1.msra.mxu0 0.0
        %655 = vmatprep.subr.mxu0 0.0
        %656 = vmatpush1.msra.mxu0 0.0
        %657 = vmatprep.subr.mxu0 0.0
        %658 = vmatpush1.msra.mxu0 0.0
        %659 = vmatprep.subr.mxu0 0.0
        %660 = vmatpush1.msra.mxu0 0.0
        %661 = vmatprep.subr.mxu0 0.0
        %662 = vmatpush1.msra.mxu0 0.0
        %663 = vmatprep.subr.mxu0 0.0
        %664 = vmatpush1.msra.mxu0 0.0
        %665 = vmatprep.subr.mxu0 0.0
        %666 = vmatpush1.msra.mxu0 0.0
        %667 = vmatprep.mubr.f32.mxu0 0.0
        %v668 = vand.u32 %v132, 4294901760
        %v669 = vsub.f32 %v132, %v668
        %v670 = vand.u32 %v669, 4294901760
        %671 = vmatmul.mubr.f32.gmra.mrb[0].mxu0 %v670
        %v672 = vpop.f32.mrb[0].mxu0
        %v673 = vadd.f32 %v584, %v672
        %v674 = vpop.f32.mrb[0].mxu0
        %675 = vdwg.mxu0
        %676 = vmatprep.subr.mxu0 0.0
        %v677 = vand.u32 %v218, 4294901760
        %v678 = vsub.f32 %v218, %v677
        %v679 = vand.u32 %v678, 4294901760
        %680 = vmatpush1.msra.mxu0 %v679
        %681 = vmatprep.subr.mxu0 0.0
        %v682 = vand.u32 %v219, 4294901760
        %v683 = vsub.f32 %v219, %v682
        %v684 = vand.u32 %v683, 4294901760
        %685 = vmatpush1.msra.mxu0 %v684
        %686 = vmatprep.subr.mxu0 0.0
        %v687 = vand.u32 %v220, 4294901760
        %v688 = vsub.f32 %v220, %v687
        %v689 = vand.u32 %v688, 4294901760
        %690 = vmatpush1.msra.mxu0 %v689
        %691 = vmatprep.subr.mxu0 0.0
        %v692 = vand.u32 %v221, 4294901760
        %v693 = vsub.f32 %v221, %v692
        %v694 = vand.u32 %v693, 4294901760
        %695 = vmatpush1.msra.mxu0 %v694
        %696 = vmatprep.subr.mxu0 0.0
        %v697 = vand.u32 %v222, 4294901760
        %v698 = vsub.f32 %v222, %v697
        %v699 = vand.u32 %v698, 4294901760
        %700 = vmatpush1.msra.mxu0 %v699
        %701 = vmatprep.subr.mxu0 0.0
        %v702 = vand.u32 %v223, 4294901760
        %v703 = vsub.f32 %v223, %v702
        %v704 = vand.u32 %v703, 4294901760
        %705 = vmatpush1.msra.mxu0 %v704
        %706 = vmatprep.subr.mxu0 0.0
        %v707 = vand.u32 %v224, 4294901760
        %v708 = vsub.f32 %v224, %v707
        %v709 = vand.u32 %v708, 4294901760
        %710 = vmatpush1.msra.mxu0 %v709
        %711 = vmatprep.subr.mxu0 0.0
        %v712 = vand.u32 %v225, 4294901760
        %v713 = vsub.f32 %v225, %v712
        %v714 = vand.u32 %v713, 4294901760
        %715 = vmatpush1.msra.mxu0 %v714
        %716 = vmatprep.subr.mxu0 0.0
        %v717 = vand.u32 %v226, 4294901760
        %v718 = vsub.f32 %v226, %v717
        %v719 = vand.u32 %v718, 4294901760
        %720 = vmatpush1.msra.mxu0 %v719
        %721 = vmatprep.subr.mxu0 0.0
        %v722 = vand.u32 %v227, 4294901760
        %v723 = vsub.f32 %v227, %v722
        %v724 = vand.u32 %v723, 4294901760
        %725 = vmatpush1.msra.mxu0 %v724
        %726 = vmatprep.subr.mxu0 0.0
        %v727 = vand.u32 %v228, 4294901760
        %v728 = vsub.f32 %v228, %v727
        %v729 = vand.u32 %v728, 4294901760
        %730 = vmatpush1.msra.mxu0 %v729
        %731 = vmatprep.subr.mxu0 0.0
        %v732 = vand.u32 %v229, 4294901760
        %v733 = vsub.f32 %v229, %v732
        %v734 = vand.u32 %v733, 4294901760
        %735 = vmatpush1.msra.mxu0 %v734
        %736 = vmatprep.subr.mxu0 0.0
        %v737 = vand.u32 %v230, 4294901760
        %v738 = vsub.f32 %v230, %v737
        %v739 = vand.u32 %v738, 4294901760
        %740 = vmatpush1.msra.mxu0 %v739
        %741 = vmatprep.subr.mxu0 0.0
        %v742 = vand.u32 %v231, 4294901760
        %v743 = vsub.f32 %v231, %v742
        %v744 = vand.u32 %v743, 4294901760
        %745 = vmatpush1.msra.mxu0 %v744
        %746 = vmatprep.subr.mxu0 0.0
        %v747 = vand.u32 %v232, 4294901760
        %v748 = vsub.f32 %v232, %v747
        %v749 = vand.u32 %v748, 4294901760
        %750 = vmatpush1.msra.mxu0 %v749
        %751 = vmatprep.subr.mxu0 0.0
        %v752 = vand.u32 %v233, 4294901760
        %v753 = vsub.f32 %v233, %v752
        %v754 = vand.u32 %v753, 4294901760
        %755 = vmatpush1.msra.mxu0 %v754
        %756 = vmatprep.subr.mxu0 0.0
        %757 = vmatpush1.msra.mxu0 0.0
        %758 = vmatprep.subr.mxu0 0.0
        %759 = vmatpush1.msra.mxu0 0.0
        %760 = vmatprep.subr.mxu0 0.0
        %761 = vmatpush1.msra.mxu0 0.0
        %762 = vmatprep.subr.mxu0 0.0
        %763 = vmatpush1.msra.mxu0 0.0
        %764 = vmatprep.subr.mxu0 0.0
        %765 = vmatpush1.msra.mxu0 0.0
        %766 = vmatprep.subr.mxu0 0.0
        %767 = vmatpush1.msra.mxu0 0.0
        %768 = vmatprep.subr.mxu0 0.0
        %769 = vmatpush1.msra.mxu0 0.0
        %770 = vmatprep.subr.mxu0 0.0
        %771 = vmatpush1.msra.mxu0 0.0
        %772 = vmatprep.subr.mxu0 0.0
        %773 = vmatpush1.msra.mxu0 0.0
        %774 = vmatprep.subr.mxu0 0.0
        %775 = vmatpush1.msra.mxu0 0.0
        %776 = vmatprep.subr.mxu0 0.0
        %777 = vmatpush1.msra.mxu0 0.0
        %778 = vmatprep.subr.mxu0 0.0
        %779 = vmatpush1.msra.mxu0 0.0
        %780 = vmatprep.subr.mxu0 0.0
        %781 = vmatpush1.msra.mxu0 0.0
        %782 = vmatprep.subr.mxu0 0.0
        %783 = vmatpush1.msra.mxu0 0.0
        %784 = vmatprep.subr.mxu0 0.0
        %785 = vmatpush1.msra.mxu0 0.0
        %786 = vmatprep.subr.mxu0 0.0
        %787 = vmatpush1.msra.mxu0 0.0
        %788 = vmatprep.mubr.f32.mxu0 0.0
        %v789 = vand.u32 %v132, 4294901760
        %790 = vmatmul.mubr.f32.gmra.mrb[0].mxu0 %v789
        %v791 = vpop.f32.mrb[0].mxu0
        %v792 = vadd.f32 %v673, %v791
        %v793 = vpop.f32.mrb[0].mxu0
        %794 = vdwg.mxu0
        %795 = vmatprep.subr.mxu0 0.0
        %v796 = vand.u32 %v218, 4294901760
        %797 = vmatpush1.msra.mxu0 %v796
        %798 = vmatprep.subr.mxu0 0.0
        %v799 = vand.u32 %v219, 4294901760
        %800 = vmatpush1.msra.mxu0 %v799
        %801 = vmatprep.subr.mxu0 0.0
        %v802 = vand.u32 %v220, 4294901760
        %803 = vmatpush1.msra.mxu0 %v802
        %804 = vmatprep.subr.mxu0 0.0
        %v805 = vand.u32 %v221, 4294901760
        %806 = vmatpush1.msra.mxu0 %v805
        %807 = vmatprep.subr.mxu0 0.0
        %v808 = vand.u32 %v222, 4294901760
        %809 = vmatpush1.msra.mxu0 %v808
        %810 = vmatprep.subr.mxu0 0.0
        %v811 = vand.u32 %v223, 4294901760
        %812 = vmatpush1.msra.mxu0 %v811
        %813 = vmatprep.subr.mxu0 0.0
        %v814 = vand.u32 %v224, 4294901760
        %815 = vmatpush1.msra.mxu0 %v814
        %816 = vmatprep.subr.mxu0 0.0
        %v817 = vand.u32 %v225, 4294901760
        %818 = vmatpush1.msra.mxu0 %v817
        %819 = vmatprep.subr.mxu0 0.0
        %v820 = vand.u32 %v226, 4294901760
        %821 = vmatpush1.msra.mxu0 %v820
        %822 = vmatprep.subr.mxu0 0.0
        %v823 = vand.u32 %v227, 4294901760
        %824 = vmatpush1.msra.mxu0 %v823
        %825 = vmatprep.subr.mxu0 0.0
        %v826 = vand.u32 %v228, 4294901760
        %827 = vmatpush1.msra.mxu0 %v826
        %828 = vmatprep.subr.mxu0 0.0
        %v829 = vand.u32 %v229, 4294901760
        %830 = vmatpush1.msra.mxu0 %v829
        %831 = vmatprep.subr.mxu0 0.0
        %v832 = vand.u32 %v230, 4294901760
        %833 = vmatpush1.msra.mxu0 %v832
        %834 = vmatprep.subr.mxu0 0.0
        %v835 = vand.u32 %v231, 4294901760
        %836 = vmatpush1.msra.mxu0 %v835
        %837 = vmatprep.subr.mxu0 0.0
        %v838 = vand.u32 %v232, 4294901760
        %839 = vmatpush1.msra.mxu0 %v838
        %840 = vmatprep.subr.mxu0 0.0
        %v841 = vand.u32 %v233, 4294901760
        %842 = vmatpush1.msra.mxu0 %v841
        %843 = vmatprep.subr.mxu0 0.0
        %844 = vmatpush1.msra.mxu0 0.0
        %845 = vmatprep.subr.mxu0 0.0
        %846 = vmatpush1.msra.mxu0 0.0
        %847 = vmatprep.subr.mxu0 0.0
        %848 = vmatpush1.msra.mxu0 0.0
        %849 = vmatprep.subr.mxu0 0.0
        %850 = vmatpush1.msra.mxu0 0.0
        %851 = vmatprep.subr.mxu0 0.0
        %852 = vmatpush1.msra.mxu0 0.0
        %853 = vmatprep.subr.mxu0 0.0
        %854 = vmatpush1.msra.mxu0 0.0
        %855 = vmatprep.subr.mxu0 0.0
        %856 = vmatpush1.msra.mxu0 0.0
        %857 = vmatprep.subr.mxu0 0.0
        %858 = vmatpush1.msra.mxu0 0.0
        %859 = vmatprep.subr.mxu0 0.0
        %860 = vmatpush1.msra.mxu0 0.0
        %861 = vmatprep.subr.mxu0 0.0
        %862 = vmatpush1.msra.mxu0 0.0
        %863 = vmatprep.subr.mxu0 0.0
        %864 = vmatpush1.msra.mxu0 0.0
        %865 = vmatprep.subr.mxu0 0.0
        %866 = vmatpush1.msra.mxu0 0.0
        %867 = vmatprep.subr.mxu0 0.0
        %868 = vmatpush1.msra.mxu0 0.0
        %869 = vmatprep.subr.mxu0 0.0
        %870 = vmatpush1.msra.mxu0 0.0
        %871 = vmatprep.subr.mxu0 0.0
        %872 = vmatpush1.msra.mxu0 0.0
        %873 = vmatprep.subr.mxu0 0.0
        %874 = vmatpush1.msra.mxu0 0.0
        %875 = vmatprep.mubr.f32.mxu0 0.0
        %v876 = vand.u32 %v132, 4294901760
        %877 = vmatmul.mubr.f32.gmra.mrb[0].mxu0 %v876
        %v878 = vpop.f32.mrb[0].mxu0
        %v879 = vadd.f32 %v792, %v878
        %v880 = vpop.f32.mrb[0].mxu0
        %881 = vdwg.mxu0
        %v882 = vmul.f32 %v879, 0.0625
        %vm883 = vcmask 64512
        %v885 = vsel %vm883, %v882, 0
        %887 = vmatprep.subr.mxu0 0.0
        %v888 = vand.u32 %v240, 4294901760
        %889 = vmatpush1.msra.mxu0 %v888
        %890 = vmatprep.subr.mxu0 0.0
        %891 = vmatpush1.msra.mxu0 0.0
        %892 = vmatprep.subr.mxu0 0.0
        %893 = vmatpush1.msra.mxu0 0.0
        %894 = vmatprep.subr.mxu0 0.0
        %895 = vmatpush1.msra.mxu0 0.0
        %896 = vmatprep.subr.mxu0 0.0
        %897 = vmatpush1.msra.mxu0 0.0
        %898 = vmatprep.subr.mxu0 0.0
        %899 = vmatpush1.msra.mxu0 0.0
        %900 = vmatprep.subr.mxu0 0.0
        %901 = vmatpush1.msra.mxu0 0.0
        %902 = vmatprep.subr.mxu0 0.0
        %903 = vmatpush1.msra.mxu0 0.0
        %904 = vmatprep.subr.mxu0 0.0
        %905 = vmatpush1.msra.mxu0 0.0
        %906 = vmatprep.subr.mxu0 0.0
        %907 = vmatpush1.msra.mxu0 0.0
        %908 = vmatprep.subr.mxu0 0.0
        %909 = vmatpush1.msra.mxu0 0.0
        %910 = vmatprep.subr.mxu0 0.0
        %911 = vmatpush1.msra.mxu0 0.0
        %912 = vmatprep.subr.mxu0 0.0
        %913 = vmatpush1.msra.mxu0 0.0
        %914 = vmatprep.subr.mxu0 0.0
        %915 = vmatpush1.msra.mxu0 0.0
        %916 = vmatprep.subr.mxu0 0.0
        %917 = vmatpush1.msra.mxu0 0.0
        %918 = vmatprep.subr.mxu0 0.0
        %919 = vmatpush1.msra.mxu0 0.0
        %920 = vmatprep.subr.mxu0 0.0
        %921 = vmatpush1.msra.mxu0 0.0
        %922 = vmatprep.subr.mxu0 0.0
        %923 = vmatpush1.msra.mxu0 0.0
        %924 = vmatprep.subr.mxu0 0.0
        %925 = vmatpush1.msra.mxu0 0.0
        %926 = vmatprep.subr.mxu0 0.0
        %927 = vmatpush1.msra.mxu0 0.0
        %928 = vmatprep.subr.mxu0 0.0
        %929 = vmatpush1.msra.mxu0 0.0
        %930 = vmatprep.subr.mxu0 0.0
        %931 = vmatpush1.msra.mxu0 0.0
        %932 = vmatprep.subr.mxu0 0.0
        %933 = vmatpush1.msra.mxu0 0.0
        %934 = vmatprep.subr.mxu0 0.0
        %935 = vmatpush1.msra.mxu0 0.0
        %936 = vmatprep.subr.mxu0 0.0
        %937 = vmatpush1.msra.mxu0 0.0
        %938 = vmatprep.subr.mxu0 0.0
        %939 = vmatpush1.msra.mxu0 0.0
        %940 = vmatprep.subr.mxu0 0.0
        %941 = vmatpush1.msra.mxu0 0.0
        %942 = vmatprep.subr.mxu0 0.0
        %943 = vmatpush1.msra.mxu0 0.0
        %944 = vmatprep.subr.mxu0 0.0
        %945 = vmatpush1.msra.mxu0 0.0
        %946 = vmatprep.subr.mxu0 0.0
        %947 = vmatpush1.msra.mxu0 0.0
        %948 = vmatprep.subr.mxu0 0.0
        %949 = vmatpush1.msra.mxu0 0.0
        %950 = vmatprep.subr.mxu0 0.0
        %951 = vmatpush1.msra.mxu0 0.0
        %952 = vmatprep.mubr.f32.mxu0 0.0
        %v953 = vand.u32 %v885, 4294901760
        %v954 = vsub.f32 %v885, %v953
        %v955 = vand.u32 %v954, 4294901760
        %v956 = vsub.f32 %v954, %v955
        %v957 = vand.u32 %v956, 4294901760
        %958 = vmatmul.mubr.f32.gmra.mrb[0].mxu0 %v957
        %v959 = vpop.f32.mrb[0].mxu0
        %v960 = vadd.f32 0.0, %v959
        %v961 = vpop.f32.mrb[0].mxu0
        %962 = vdwg.mxu0
        %963 = vmatprep.subr.mxu0 0.0
        %v964 = vand.u32 %v240, 4294901760
        %v965 = vsub.f32 %v240, %v964
        %v966 = vand.u32 %v965, 4294901760
        %v967 = vsub.f32 %v965, %v966
        %v968 = vand.u32 %v967, 4294901760
        %969 = vmatpush1.msra.mxu0 %v968
        %970 = vmatprep.subr.mxu0 0.0
        %971 = vmatpush1.msra.mxu0 0.0
        %972 = vmatprep.subr.mxu0 0.0
        %973 = vmatpush1.msra.mxu0 0.0
        %974 = vmatprep.subr.mxu0 0.0
        %975 = vmatpush1.msra.mxu0 0.0
        %976 = vmatprep.subr.mxu0 0.0
        %977 = vmatpush1.msra.mxu0 0.0
        %978 = vmatprep.subr.mxu0 0.0
        %979 = vmatpush1.msra.mxu0 0.0
        %980 = vmatprep.subr.mxu0 0.0
        %981 = vmatpush1.msra.mxu0 0.0
        %982 = vmatprep.subr.mxu0 0.0
        %983 = vmatpush1.msra.mxu0 0.0
        %984 = vmatprep.subr.mxu0 0.0
        %985 = vmatpush1.msra.mxu0 0.0
        %986 = vmatprep.subr.mxu0 0.0
        %987 = vmatpush1.msra.mxu0 0.0
        %988 = vmatprep.subr.mxu0 0.0
        %989 = vmatpush1.msra.mxu0 0.0
        %990 = vmatprep.subr.mxu0 0.0
        %991 = vmatpush1.msra.mxu0 0.0
        %992 = vmatprep.subr.mxu0 0.0
        %993 = vmatpush1.msra.mxu0 0.0
        %994 = vmatprep.subr.mxu0 0.0
        %995 = vmatpush1.msra.mxu0 0.0
        %996 = vmatprep.subr.mxu0 0.0
        %997 = vmatpush1.msra.mxu0 0.0
        %998 = vmatprep.subr.mxu0 0.0
        %999 = vmatpush1.msra.mxu0 0.0
        %1000 = vmatprep.subr.mxu0 0.0
        %1001 = vmatpush1.msra.mxu0 0.0
        %1002 = vmatprep.subr.mxu0 0.0
        %1003 = vmatpush1.msra.mxu0 0.0
        %1004 = vmatprep.subr.mxu0 0.0
        %1005 = vmatpush1.msra.mxu0 0.0
        %1006 = vmatprep.subr.mxu0 0.0
        %1007 = vmatpush1.msra.mxu0 0.0
        %1008 = vmatprep.subr.mxu0 0.0
        %1009 = vmatpush1.msra.mxu0 0.0
        %1010 = vmatprep.subr.mxu0 0.0
        %1011 = vmatpush1.msra.mxu0 0.0
        %1012 = vmatprep.subr.mxu0 0.0
        %1013 = vmatpush1.msra.mxu0 0.0
        %1014 = vmatprep.subr.mxu0 0.0
        %1015 = vmatpush1.msra.mxu0 0.0
        %1016 = vmatprep.subr.mxu0 0.0
        %1017 = vmatpush1.msra.mxu0 0.0
        %1018 = vmatprep.subr.mxu0 0.0
        %1019 = vmatpush1.msra.mxu0 0.0
        %1020 = vmatprep.subr.mxu0 0.0
        %1021 = vmatpush1.msra.mxu0 0.0
        %1022 = vmatprep.subr.mxu0 0.0
        %1023 = vmatpush1.msra.mxu0 0.0
        %1024 = vmatprep.subr.mxu0 0.0
        %1025 = vmatpush1.msra.mxu0 0.0
        %1026 = vmatprep.subr.mxu0 0.0
        %1027 = vmatpush1.msra.mxu0 0.0
        %1028 = vmatprep.subr.mxu0 0.0
        %1029 = vmatpush1.msra.mxu0 0.0
        %1030 = vmatprep.subr.mxu0 0.0
        %1031 = vmatpush1.msra.mxu0 0.0
        %1032 = vmatprep.mubr.f32.mxu0 0.0
        %v1033 = vand.u32 %v885, 4294901760
        %1034 = vmatmul.mubr.f32.gmra.mrb[0].mxu0 %v1033
        %v1035 = vpop.f32.mrb[0].mxu0
        %v1036 = vadd.f32 %v960, %v1035
        %v1037 = vpop.f32.mrb[0].mxu0
        %1038 = vdwg.mxu0
        %1039 = vmatprep.subr.mxu0 0.0
        %v1040 = vand.u32 %v240, 4294901760
        %v1041 = vsub.f32 %v240, %v1040
        %1042 = vmatpush1.msra.mxu0 %v1041
        %1043 = vmatprep.subr.mxu0 0.0
        %1044 = vmatpush1.msra.mxu0 0.0
        %1045 = vmatprep.subr.mxu0 0.0
        %1046 = vmatpush1.msra.mxu0 0.0
        %1047 = vmatprep.subr.mxu0 0.0
        %1048 = vmatpush1.msra.mxu0 0.0
        %1049 = vmatprep.subr.mxu0 0.0
        %1050 = vmatpush1.msra.mxu0 0.0
        %1051 = vmatprep.subr.mxu0 0.0
        %1052 = vmatpush1.msra.mxu0 0.0
        %1053 = vmatprep.subr.mxu0 0.0
        %1054 = vmatpush1.msra.mxu0 0.0
        %1055 = vmatprep.subr.mxu0 0.0
        %1056 = vmatpush1.msra.mxu0 0.0
        %1057 = vmatprep.subr.mxu0 0.0
        %1058 = vmatpush1.msra.mxu0 0.0
        %1059 = vmatprep.subr.mxu0 0.0
        %1060 = vmatpush1.msra.mxu0 0.0
        %1061 = vmatprep.subr.mxu0 0.0
        %1062 = vmatpush1.msra.mxu0 0.0
        %1063 = vmatprep.subr.mxu0 0.0
        %1064 = vmatpush1.msra.mxu0 0.0
        %1065 = vmatprep.subr.mxu0 0.0
        %1066 = vmatpush1.msra.mxu0 0.0
        %1067 = vmatprep.subr.mxu0 0.0
        %1068 = vmatpush1.msra.mxu0 0.0
        %1069 = vmatprep.subr.mxu0 0.0
        %1070 = vmatpush1.msra.mxu0 0.0
        %1071 = vmatprep.subr.mxu0 0.0
        %1072 = vmatpush1.msra.mxu0 0.0
        %1073 = vmatprep.subr.mxu0 0.0
        %1074 = vmatpush1.msra.mxu0 0.0
        %1075 = vmatprep.subr.mxu0 0.0
        %1076 = vmatpush1.msra.mxu0 0.0
        %1077 = vmatprep.subr.mxu0 0.0
        %1078 = vmatpush1.msra.mxu0 0.0
        %1079 = vmatprep.subr.mxu0 0.0
        %1080 = vmatpush1.msra.mxu0 0.0
        %1081 = vmatprep.subr.mxu0 0.0
        %1082 = vmatpush1.msra.mxu0 0.0
        %1083 = vmatprep.subr.mxu0 0.0
        %1084 = vmatpush1.msra.mxu0 0.0
        %1085 = vmatprep.subr.mxu0 0.0
        %1086 = vmatpush1.msra.mxu0 0.0
        %1087 = vmatprep.subr.mxu0 0.0
        %1088 = vmatpush1.msra.mxu0 0.0
        %1089 = vmatprep.subr.mxu0 0.0
        %1090 = vmatpush1.msra.mxu0 0.0
        %1091 = vmatprep.subr.mxu0 0.0
        %1092 = vmatpush1.msra.mxu0 0.0
        %1093 = vmatprep.subr.mxu0 0.0
        %1094 = vmatpush1.msra.mxu0 0.0
        %1095 = vmatprep.subr.mxu0 0.0
        %1096 = vmatpush1.msra.mxu0 0.0
        %1097 = vmatprep.subr.mxu0 0.0
        %1098 = vmatpush1.msra.mxu0 0.0
        %1099 = vmatprep.subr.mxu0 0.0
        %1100 = vmatpush1.msra.mxu0 0.0
        %1101 = vmatprep.subr.mxu0 0.0
        %1102 = vmatpush1.msra.mxu0 0.0
        %1103 = vmatprep.subr.mxu0 0.0
        %1104 = vmatpush1.msra.mxu0 0.0
        %1105 = vmatprep.mubr.f32.mxu0 0.0
        %v1106 = vand.u32 %v885, 4294901760
        %v1107 = vsub.f32 %v885, %v1106
        %1108 = vmatmul.mubr.f32.gmra.mrb[0].mxu0 %v1107
        %v1109 = vpop.f32.mrb[0].mxu0
        %v1110 = vadd.f32 %v1036, %v1109
        %v1111 = vpop.f32.mrb[0].mxu0
        %1112 = vdwg.mxu0
        %1113 = vmatprep.subr.mxu0 0.0
        %v1114 = vand.u32 %v240, 4294901760
        %1115 = vmatpush1.msra.mxu0 %v1114
        %1116 = vmatprep.subr.mxu0 0.0
        %1117 = vmatpush1.msra.mxu0 0.0
        %1118 = vmatprep.subr.mxu0 0.0
        %1119 = vmatpush1.msra.mxu0 0.0
        %1120 = vmatprep.subr.mxu0 0.0
        %1121 = vmatpush1.msra.mxu0 0.0
        %1122 = vmatprep.subr.mxu0 0.0
        %1123 = vmatpush1.msra.mxu0 0.0
        %1124 = vmatprep.subr.mxu0 0.0
        %1125 = vmatpush1.msra.mxu0 0.0
        %1126 = vmatprep.subr.mxu0 0.0
        %1127 = vmatpush1.msra.mxu0 0.0
        %1128 = vmatprep.subr.mxu0 0.0
        %1129 = vmatpush1.msra.mxu0 0.0
        %1130 = vmatprep.subr.mxu0 0.0
        %1131 = vmatpush1.msra.mxu0 0.0
        %1132 = vmatprep.subr.mxu0 0.0
        %1133 = vmatpush1.msra.mxu0 0.0
        %1134 = vmatprep.subr.mxu0 0.0
        %1135 = vmatpush1.msra.mxu0 0.0
        %1136 = vmatprep.subr.mxu0 0.0
        %1137 = vmatpush1.msra.mxu0 0.0
        %1138 = vmatprep.subr.mxu0 0.0
        %1139 = vmatpush1.msra.mxu0 0.0
        %1140 = vmatprep.subr.mxu0 0.0
        %1141 = vmatpush1.msra.mxu0 0.0
        %1142 = vmatprep.subr.mxu0 0.0
        %1143 = vmatpush1.msra.mxu0 0.0
        %1144 = vmatprep.subr.mxu0 0.0
        %1145 = vmatpush1.msra.mxu0 0.0
        %1146 = vmatprep.subr.mxu0 0.0
        %1147 = vmatpush1.msra.mxu0 0.0
        %1148 = vmatprep.subr.mxu0 0.0
        %1149 = vmatpush1.msra.mxu0 0.0
        %1150 = vmatprep.subr.mxu0 0.0
        %1151 = vmatpush1.msra.mxu0 0.0
        %1152 = vmatprep.subr.mxu0 0.0
        %1153 = vmatpush1.msra.mxu0 0.0
        %1154 = vmatprep.subr.mxu0 0.0
        %1155 = vmatpush1.msra.mxu0 0.0
        %1156 = vmatprep.subr.mxu0 0.0
        %1157 = vmatpush1.msra.mxu0 0.0
        %1158 = vmatprep.subr.mxu0 0.0
        %1159 = vmatpush1.msra.mxu0 0.0
        %1160 = vmatprep.subr.mxu0 0.0
        %1161 = vmatpush1.msra.mxu0 0.0
        %1162 = vmatprep.subr.mxu0 0.0
        %1163 = vmatpush1.msra.mxu0 0.0
        %1164 = vmatprep.subr.mxu0 0.0
        %1165 = vmatpush1.msra.mxu0 0.0
        %1166 = vmatprep.subr.mxu0 0.0
        %1167 = vmatpush1.msra.mxu0 0.0
        %1168 = vmatprep.subr.mxu0 0.0
        %1169 = vmatpush1.msra.mxu0 0.0
        %1170 = vmatprep.subr.mxu0 0.0
        %1171 = vmatpush1.msra.mxu0 0.0
        %1172 = vmatprep.subr.mxu0 0.0
        %1173 = vmatpush1.msra.mxu0 0.0
        %1174 = vmatprep.subr.mxu0 0.0
        %1175 = vmatpush1.msra.mxu0 0.0
        %1176 = vmatprep.subr.mxu0 0.0
        %1177 = vmatpush1.msra.mxu0 0.0
        %1178 = vmatprep.mubr.f32.mxu0 0.0
        %v1179 = vand.u32 %v885, 4294901760
        %v1180 = vsub.f32 %v885, %v1179
        %v1181 = vand.u32 %v1180, 4294901760
        %1182 = vmatmul.mubr.f32.gmra.mrb[0].mxu0 %v1181
        %v1183 = vpop.f32.mrb[0].mxu0
        %v1184 = vadd.f32 %v1110, %v1183
        %v1185 = vpop.f32.mrb[0].mxu0
        %1186 = vdwg.mxu0
        %1187 = vmatprep.subr.mxu0 0.0
        %v1188 = vand.u32 %v240, 4294901760
        %v1189 = vsub.f32 %v240, %v1188
        %v1190 = vand.u32 %v1189, 4294901760
        %1191 = vmatpush1.msra.mxu0 %v1190
        %1192 = vmatprep.subr.mxu0 0.0
        %1193 = vmatpush1.msra.mxu0 0.0
        %1194 = vmatprep.subr.mxu0 0.0
        %1195 = vmatpush1.msra.mxu0 0.0
        %1196 = vmatprep.subr.mxu0 0.0
        %1197 = vmatpush1.msra.mxu0 0.0
        %1198 = vmatprep.subr.mxu0 0.0
        %1199 = vmatpush1.msra.mxu0 0.0
        %1200 = vmatprep.subr.mxu0 0.0
        %1201 = vmatpush1.msra.mxu0 0.0
        %1202 = vmatprep.subr.mxu0 0.0
        %1203 = vmatpush1.msra.mxu0 0.0
        %1204 = vmatprep.subr.mxu0 0.0
        %1205 = vmatpush1.msra.mxu0 0.0
        %1206 = vmatprep.subr.mxu0 0.0
        %1207 = vmatpush1.msra.mxu0 0.0
        %1208 = vmatprep.subr.mxu0 0.0
        %1209 = vmatpush1.msra.mxu0 0.0
        %1210 = vmatprep.subr.mxu0 0.0
        %1211 = vmatpush1.msra.mxu0 0.0
        %1212 = vmatprep.subr.mxu0 0.0
        %1213 = vmatpush1.msra.mxu0 0.0
        %1214 = vmatprep.subr.mxu0 0.0
        %1215 = vmatpush1.msra.mxu0 0.0
        %1216 = vmatprep.subr.mxu0 0.0
        %1217 = vmatpush1.msra.mxu0 0.0
        %1218 = vmatprep.subr.mxu0 0.0
        %1219 = vmatpush1.msra.mxu0 0.0
        %1220 = vmatprep.subr.mxu0 0.0
        %1221 = vmatpush1.msra.mxu0 0.0
        %1222 = vmatprep.subr.mxu0 0.0
        %1223 = vmatpush1.msra.mxu0 0.0
        %1224 = vmatprep.subr.mxu0 0.0
        %1225 = vmatpush1.msra.mxu0 0.0
        %1226 = vmatprep.subr.mxu0 0.0
        %1227 = vmatpush1.msra.mxu0 0.0
        %1228 = vmatprep.subr.mxu0 0.0
        %1229 = vmatpush1.msra.mxu0 0.0
        %1230 = vmatprep.subr.mxu0 0.0
        %1231 = vmatpush1.msra.mxu0 0.0
        %1232 = vmatprep.subr.mxu0 0.0
        %1233 = vmatpush1.msra.mxu0 0.0
        %1234 = vmatprep.subr.mxu0 0.0
        %1235 = vmatpush1.msra.mxu0 0.0
        %1236 = vmatprep.subr.mxu0 0.0
        %1237 = vmatpush1.msra.mxu0 0.0
        %1238 = vmatprep.subr.mxu0 0.0
        %1239 = vmatpush1.msra.mxu0 0.0
        %1240 = vmatprep.subr.mxu0 0.0
        %1241 = vmatpush1.msra.mxu0 0.0
        %1242 = vmatprep.subr.mxu0 0.0
        %1243 = vmatpush1.msra.mxu0 0.0
        %1244 = vmatprep.subr.mxu0 0.0
        %1245 = vmatpush1.msra.mxu0 0.0
        %1246 = vmatprep.subr.mxu0 0.0
        %1247 = vmatpush1.msra.mxu0 0.0
        %1248 = vmatprep.subr.mxu0 0.0
        %1249 = vmatpush1.msra.mxu0 0.0
        %1250 = vmatprep.subr.mxu0 0.0
        %1251 = vmatpush1.msra.mxu0 0.0
        %1252 = vmatprep.subr.mxu0 0.0
        %1253 = vmatpush1.msra.mxu0 0.0
        %1254 = vmatprep.mubr.f32.mxu0 0.0
        %v1255 = vand.u32 %v885, 4294901760
        %1256 = vmatmul.mubr.f32.gmra.mrb[0].mxu0 %v1255
        %v1257 = vpop.f32.mrb[0].mxu0
        %v1258 = vadd.f32 %v1184, %v1257
        %v1259 = vpop.f32.mrb[0].mxu0
        %1260 = vdwg.mxu0
        %1261 = vmatprep.subr.mxu0 0.0
        %v1262 = vand.u32 %v240, 4294901760
        %1263 = vmatpush1.msra.mxu0 %v1262
        %1264 = vmatprep.subr.mxu0 0.0
        %1265 = vmatpush1.msra.mxu0 0.0
        %1266 = vmatprep.subr.mxu0 0.0
        %1267 = vmatpush1.msra.mxu0 0.0
        %1268 = vmatprep.subr.mxu0 0.0
        %1269 = vmatpush1.msra.mxu0 0.0
        %1270 = vmatprep.subr.mxu0 0.0
        %1271 = vmatpush1.msra.mxu0 0.0
        %1272 = vmatprep.subr.mxu0 0.0
        %1273 = vmatpush1.msra.mxu0 0.0
        %1274 = vmatprep.subr.mxu0 0.0
        %1275 = vmatpush1.msra.mxu0 0.0
        %1276 = vmatprep.subr.mxu0 0.0
        %1277 = vmatpush1.msra.mxu0 0.0
        %1278 = vmatprep.subr.mxu0 0.0
        %1279 = vmatpush1.msra.mxu0 0.0
        %1280 = vmatprep.subr.mxu0 0.0
        %1281 = vmatpush1.msra.mxu0 0.0
        %1282 = vmatprep.subr.mxu0 0.0
        %1283 = vmatpush1.msra.mxu0 0.0
        %1284 = vmatprep.subr.mxu0 0.0
        %1285 = vmatpush1.msra.mxu0 0.0
        %1286 = vmatprep.subr.mxu0 0.0
        %1287 = vmatpush1.msra.mxu0 0.0
        %1288 = vmatprep.subr.mxu0 0.0
        %1289 = vmatpush1.msra.mxu0 0.0
        %1290 = vmatprep.subr.mxu0 0.0
        %1291 = vmatpush1.msra.mxu0 0.0
        %1292 = vmatprep.subr.mxu0 0.0
        %1293 = vmatpush1.msra.mxu0 0.0
        %1294 = vmatprep.subr.mxu0 0.0
        %1295 = vmatpush1.msra.mxu0 0.0
        %1296 = vmatprep.subr.mxu0 0.0
        %1297 = vmatpush1.msra.mxu0 0.0
        %1298 = vmatprep.subr.mxu0 0.0
        %1299 = vmatpush1.msra.mxu0 0.0
        %1300 = vmatprep.subr.mxu0 0.0
        %1301 = vmatpush1.msra.mxu0 0.0
        %1302 = vmatprep.subr.mxu0 0.0
        %1303 = vmatpush1.msra.mxu0 0.0
        %1304 = vmatprep.subr.mxu0 0.0
        %1305 = vmatpush1.msra.mxu0 0.0
        %1306 = vmatprep.subr.mxu0 0.0
        %1307 = vmatpush1.msra.mxu0 0.0
        %1308 = vmatprep.subr.mxu0 0.0
        %1309 = vmatpush1.msra.mxu0 0.0
        %1310 = vmatprep.subr.mxu0 0.0
        %1311 = vmatpush1.msra.mxu0 0.0
        %1312 = vmatprep.subr.mxu0 0.0
        %1313 = vmatpush1.msra.mxu0 0.0
        %1314 = vmatprep.subr.mxu0 0.0
        %1315 = vmatpush1.msra.mxu0 0.0
        %1316 = vmatprep.subr.mxu0 0.0
        %1317 = vmatpush1.msra.mxu0 0.0
        %1318 = vmatprep.subr.mxu0 0.0
        %1319 = vmatpush1.msra.mxu0 0.0
        %1320 = vmatprep.subr.mxu0 0.0
        %1321 = vmatpush1.msra.mxu0 0.0
        %1322 = vmatprep.subr.mxu0 0.0
        %1323 = vmatpush1.msra.mxu0 0.0
        %1324 = vmatprep.subr.mxu0 0.0
        %1325 = vmatpush1.msra.mxu0 0.0
        %1326 = vmatprep.mubr.f32.mxu0 0.0
        %v1327 = vand.u32 %v885, 4294901760
        %1328 = vmatmul.mubr.f32.gmra.mrb[0].mxu0 %v1327
        %v1329 = vpop.f32.mrb[0].mxu0
        %v1330 = vadd.f32 %v1258, %v1329
        %v1331 = vpop.f32.mrb[0].mxu0
        %1332 = vdwg.mxu0
        %v1333 = vsub.f32 %v132, %v1330
        %1334 = vmatprep.subr.mxu0 0.0
        %v1335 = vand.u32 %v218, 4294901760
        %1336 = vmatpush1.msra.mxu0 %v1335
        %1337 = vmatprep.subr.mxu0 0.0
        %v1338 = vand.u32 %v219, 4294901760
        %1339 = vmatpush1.msra.mxu0 %v1338
        %1340 = vmatprep.subr.mxu0 0.0
        %v1341 = vand.u32 %v220, 4294901760
        %1342 = vmatpush1.msra.mxu0 %v1341
        %1343 = vmatprep.subr.mxu0 0.0
        %v1344 = vand.u32 %v221, 4294901760
        %1345 = vmatpush1.msra.mxu0 %v1344
        %1346 = vmatprep.subr.mxu0 0.0
        %v1347 = vand.u32 %v222, 4294901760
        %1348 = vmatpush1.msra.mxu0 %v1347
        %1349 = vmatprep.subr.mxu0 0.0
        %v1350 = vand.u32 %v223, 4294901760
        %1351 = vmatpush1.msra.mxu0 %v1350
        %1352 = vmatprep.subr.mxu0 0.0
        %v1353 = vand.u32 %v224, 4294901760
        %1354 = vmatpush1.msra.mxu0 %v1353
        %1355 = vmatprep.subr.mxu0 0.0
        %v1356 = vand.u32 %v225, 4294901760
        %1357 = vmatpush1.msra.mxu0 %v1356
        %1358 = vmatprep.subr.mxu0 0.0
        %v1359 = vand.u32 %v226, 4294901760
        %1360 = vmatpush1.msra.mxu0 %v1359
        %1361 = vmatprep.subr.mxu0 0.0
        %v1362 = vand.u32 %v227, 4294901760
        %1363 = vmatpush1.msra.mxu0 %v1362
        %1364 = vmatprep.subr.mxu0 0.0
        %v1365 = vand.u32 %v228, 4294901760
        %1366 = vmatpush1.msra.mxu0 %v1365
        %1367 = vmatprep.subr.mxu0 0.0
        %v1368 = vand.u32 %v229, 4294901760
        %1369 = vmatpush1.msra.mxu0 %v1368
        %1370 = vmatprep.subr.mxu0 0.0
        %v1371 = vand.u32 %v230, 4294901760
        %1372 = vmatpush1.msra.mxu0 %v1371
        %1373 = vmatprep.subr.mxu0 0.0
        %v1374 = vand.u32 %v231, 4294901760
        %1375 = vmatpush1.msra.mxu0 %v1374
        %1376 = vmatprep.subr.mxu0 0.0
        %v1377 = vand.u32 %v232, 4294901760
        %1378 = vmatpush1.msra.mxu0 %v1377
        %1379 = vmatprep.subr.mxu0 0.0
        %v1380 = vand.u32 %v233, 4294901760
        %1381 = vmatpush1.msra.mxu0 %v1380
        %1382 = vmatprep.subr.mxu0 0.0
        %1383 = vmatpush1.msra.mxu0 0.0
        %1384 = vmatprep.subr.mxu0 0.0
        %1385 = vmatpush1.msra.mxu0 0.0
        %1386 = vmatprep.subr.mxu0 0.0
        %1387 = vmatpush1.msra.mxu0 0.0
        %1388 = vmatprep.subr.mxu0 0.0
        %1389 = vmatpush1.msra.mxu0 0.0
        %1390 = vmatprep.subr.mxu0 0.0
        %1391 = vmatpush1.msra.mxu0 0.0
        %1392 = vmatprep.subr.mxu0 0.0
        %1393 = vmatpush1.msra.mxu0 0.0
        %1394 = vmatprep.subr.mxu0 0.0
        %1395 = vmatpush1.msra.mxu0 0.0
        %1396 = vmatprep.subr.mxu0 0.0
        %1397 = vmatpush1.msra.mxu0 0.0
        %1398 = vmatprep.subr.mxu0 0.0
        %1399 = vmatpush1.msra.mxu0 0.0
        %1400 = vmatprep.subr.mxu0 0.0
        %1401 = vmatpush1.msra.mxu0 0.0
        %1402 = vmatprep.subr.mxu0 0.0
        %1403 = vmatpush1.msra.mxu0 0.0
        %1404 = vmatprep.subr.mxu0 0.0
        %1405 = vmatpush1.msra.mxu0 0.0
        %1406 = vmatprep.subr.mxu0 0.0
        %1407 = vmatpush1.msra.mxu0 0.0
        %1408 = vmatprep.subr.mxu0 0.0
        %1409 = vmatpush1.msra.mxu0 0.0
        %1410 = vmatprep.subr.mxu0 0.0
        %1411 = vmatpush1.msra.mxu0 0.0
        %1412 = vmatprep.subr.mxu0 0.0
        %1413 = vmatpush1.msra.mxu0 0.0
        %1414 = vmatprep.mubr.f32.mxu0 0.0
        %v1415 = vand.u32 %v1333, 4294901760
        %v1416 = vsub.f32 %v1333, %v1415
        %v1417 = vand.u32 %v1416, 4294901760
        %v1418 = vsub.f32 %v1416, %v1417
        %v1419 = vand.u32 %v1418, 4294901760
        %1420 = vmatmul.mubr.f32.gmra.mrb[0].mxu0 %v1419
        %v1421 = vpop.f32.mrb[0].mxu0
        %v1422 = vadd.f32 0.0, %v1421
        %v1423 = vpop.f32.mrb[0].mxu0
        %1424 = vdwg.mxu0
        %1425 = vmatprep.subr.mxu0 0.0
        %v1426 = vand.u32 %v218, 4294901760
        %v1427 = vsub.f32 %v218, %v1426
        %v1428 = vand.u32 %v1427, 4294901760
        %v1429 = vsub.f32 %v1427, %v1428
        %v1430 = vand.u32 %v1429, 4294901760
        %1431 = vmatpush1.msra.mxu0 %v1430
        %1432 = vmatprep.subr.mxu0 0.0
        %v1433 = vand.u32 %v219, 4294901760
        %v1434 = vsub.f32 %v219, %v1433
        %v1435 = vand.u32 %v1434, 4294901760
        %v1436 = vsub.f32 %v1434, %v1435
        %v1437 = vand.u32 %v1436, 4294901760
        %1438 = vmatpush1.msra.mxu0 %v1437
        %1439 = vmatprep.subr.mxu0 0.0
        %v1440 = vand.u32 %v220, 4294901760
        %v1441 = vsub.f32 %v220, %v1440
        %v1442 = vand.u32 %v1441, 4294901760
        %v1443 = vsub.f32 %v1441, %v1442
        %v1444 = vand.u32 %v1443, 4294901760
        %1445 = vmatpush1.msra.mxu0 %v1444
        %1446 = vmatprep.subr.mxu0 0.0
        %v1447 = vand.u32 %v221, 4294901760
        %v1448 = vsub.f32 %v221, %v1447
        %v1449 = vand.u32 %v1448, 4294901760
        %v1450 = vsub.f32 %v1448, %v1449
        %v1451 = vand.u32 %v1450, 4294901760
        %1452 = vmatpush1.msra.mxu0 %v1451
        %1453 = vmatprep.subr.mxu0 0.0
        %v1454 = vand.u32 %v222, 4294901760
        %v1455 = vsub.f32 %v222, %v1454
        %v1456 = vand.u32 %v1455, 4294901760
        %v1457 = vsub.f32 %v1455, %v1456
        %v1458 = vand.u32 %v1457, 4294901760
        %1459 = vmatpush1.msra.mxu0 %v1458
        %1460 = vmatprep.subr.mxu0 0.0
        %v1461 = vand.u32 %v223, 4294901760
        %v1462 = vsub.f32 %v223, %v1461
        %v1463 = vand.u32 %v1462, 4294901760
        %v1464 = vsub.f32 %v1462, %v1463
        %v1465 = vand.u32 %v1464, 4294901760
        %1466 = vmatpush1.msra.mxu0 %v1465
        %1467 = vmatprep.subr.mxu0 0.0
        %v1468 = vand.u32 %v224, 4294901760
        %v1469 = vsub.f32 %v224, %v1468
        %v1470 = vand.u32 %v1469, 4294901760
        %v1471 = vsub.f32 %v1469, %v1470
        %v1472 = vand.u32 %v1471, 4294901760
        %1473 = vmatpush1.msra.mxu0 %v1472
        %1474 = vmatprep.subr.mxu0 0.0
        %v1475 = vand.u32 %v225, 4294901760
        %v1476 = vsub.f32 %v225, %v1475
        %v1477 = vand.u32 %v1476, 4294901760
        %v1478 = vsub.f32 %v1476, %v1477
        %v1479 = vand.u32 %v1478, 4294901760
        %1480 = vmatpush1.msra.mxu0 %v1479
        %1481 = vmatprep.subr.mxu0 0.0
        %v1482 = vand.u32 %v226, 4294901760
        %v1483 = vsub.f32 %v226, %v1482
        %v1484 = vand.u32 %v1483, 4294901760
        %v1485 = vsub.f32 %v1483, %v1484
        %v1486 = vand.u32 %v1485, 4294901760
        %1487 = vmatpush1.msra.mxu0 %v1486
        %1488 = vmatprep.subr.mxu0 0.0
        %v1489 = vand.u32 %v227, 4294901760
        %v1490 = vsub.f32 %v227, %v1489
        %v1491 = vand.u32 %v1490, 4294901760
        %v1492 = vsub.f32 %v1490, %v1491
        %v1493 = vand.u32 %v1492, 4294901760
        %1494 = vmatpush1.msra.mxu0 %v1493
        %1495 = vmatprep.subr.mxu0 0.0
        %v1496 = vand.u32 %v228, 4294901760
        %v1497 = vsub.f32 %v228, %v1496
        %v1498 = vand.u32 %v1497, 4294901760
        %v1499 = vsub.f32 %v1497, %v1498
        %v1500 = vand.u32 %v1499, 4294901760
        %1501 = vmatpush1.msra.mxu0 %v1500
        %1502 = vmatprep.subr.mxu0 0.0
        %v1503 = vand.u32 %v229, 4294901760
        %v1504 = vsub.f32 %v229, %v1503
        %v1505 = vand.u32 %v1504, 4294901760
        %v1506 = vsub.f32 %v1504, %v1505
        %v1507 = vand.u32 %v1506, 4294901760
        %1508 = vmatpush1.msra.mxu0 %v1507
        %1509 = vmatprep.subr.mxu0 0.0
        %v1510 = vand.u32 %v230, 4294901760
        %v1511 = vsub.f32 %v230, %v1510
        %v1512 = vand.u32 %v1511, 4294901760
        %v1513 = vsub.f32 %v1511, %v1512
        %v1514 = vand.u32 %v1513, 4294901760
        %1515 = vmatpush1.msra.mxu0 %v1514
        %1516 = vmatprep.subr.mxu0 0.0
        %v1517 = vand.u32 %v231, 4294901760
        %v1518 = vsub.f32 %v231, %v1517
        %v1519 = vand.u32 %v1518, 4294901760
        %v1520 = vsub.f32 %v1518, %v1519
        %v1521 = vand.u32 %v1520, 4294901760
        %1522 = vmatpush1.msra.mxu0 %v1521
        %1523 = vmatprep.subr.mxu0 0.0
        %v1524 = vand.u32 %v232, 4294901760
        %v1525 = vsub.f32 %v232, %v1524
        %v1526 = vand.u32 %v1525, 4294901760
        %v1527 = vsub.f32 %v1525, %v1526
        %v1528 = vand.u32 %v1527, 4294901760
        %1529 = vmatpush1.msra.mxu0 %v1528
        %1530 = vmatprep.subr.mxu0 0.0
        %v1531 = vand.u32 %v233, 4294901760
        %v1532 = vsub.f32 %v233, %v1531
        %v1533 = vand.u32 %v1532, 4294901760
        %v1534 = vsub.f32 %v1532, %v1533
        %v1535 = vand.u32 %v1534, 4294901760
        %1536 = vmatpush1.msra.mxu0 %v1535
        %1537 = vmatprep.subr.mxu0 0.0
        %1538 = vmatpush1.msra.mxu0 0.0
        %1539 = vmatprep.subr.mxu0 0.0
        %1540 = vmatpush1.msra.mxu0 0.0
        %1541 = vmatprep.subr.mxu0 0.0
        %1542 = vmatpush1.msra.mxu0 0.0
        %1543 = vmatprep.subr.mxu0 0.0
        %1544 = vmatpush1.msra.mxu0 0.0
        %1545 = vmatprep.subr.mxu0 0.0
        %1546 = vmatpush1.msra.mxu0 0.0
        %1547 = vmatprep.subr.mxu0 0.0
        %1548 = vmatpush1.msra.mxu0 0.0
        %1549 = vmatprep.subr.mxu0 0.0
        %1550 = vmatpush1.msra.mxu0 0.0
        %1551 = vmatprep.subr.mxu0 0.0
        %1552 = vmatpush1.msra.mxu0 0.0
        %1553 = vmatprep.subr.mxu0 0.0
        %1554 = vmatpush1.msra.mxu0 0.0
        %1555 = vmatprep.subr.mxu0 0.0
        %1556 = vmatpush1.msra.mxu0 0.0
        %1557 = vmatprep.subr.mxu0 0.0
        %1558 = vmatpush1.msra.mxu0 0.0
        %1559 = vmatprep.subr.mxu0 0.0
        %1560 = vmatpush1.msra.mxu0 0.0
        %1561 = vmatprep.subr.mxu0 0.0
        %1562 = vmatpush1.msra.mxu0 0.0
        %1563 = vmatprep.subr.mxu0 0.0
        %1564 = vmatpush1.msra.mxu0 0.0
        %1565 = vmatprep.subr.mxu0 0.0
        %1566 = vmatpush1.msra.mxu0 0.0
        %1567 = vmatprep.subr.mxu0 0.0
        %1568 = vmatpush1.msra.mxu0 0.0
        %1569 = vmatprep.mubr.f32.mxu0 0.0
        %v1570 = vand.u32 %v1333, 4294901760
        %1571 = vmatmul.mubr.f32.gmra.mrb[0].mxu0 %v1570
        %v1572 = vpop.f32.mrb[0].mxu0
        %v1573 = vadd.f32 %v1422, %v1572
        %v1574 = vpop.f32.mrb[0].mxu0
        %1575 = vdwg.mxu0
        %1576 = vmatprep.subr.mxu0 0.0
        %v1577 = vand.u32 %v218, 4294901760
        %v1578 = vsub.f32 %v218, %v1577
        %1579 = vmatpush1.msra.mxu0 %v1578
        %1580 = vmatprep.subr.mxu0 0.0
        %v1581 = vand.u32 %v219, 4294901760
        %v1582 = vsub.f32 %v219, %v1581
        %1583 = vmatpush1.msra.mxu0 %v1582
        %1584 = vmatprep.subr.mxu0 0.0
        %v1585 = vand.u32 %v220, 4294901760
        %v1586 = vsub.f32 %v220, %v1585
        %1587 = vmatpush1.msra.mxu0 %v1586
        %1588 = vmatprep.subr.mxu0 0.0
        %v1589 = vand.u32 %v221, 4294901760
        %v1590 = vsub.f32 %v221, %v1589
        %1591 = vmatpush1.msra.mxu0 %v1590
        %1592 = vmatprep.subr.mxu0 0.0
        %v1593 = vand.u32 %v222, 4294901760
        %v1594 = vsub.f32 %v222, %v1593
        %1595 = vmatpush1.msra.mxu0 %v1594
        %1596 = vmatprep.subr.mxu0 0.0
        %v1597 = vand.u32 %v223, 4294901760
        %v1598 = vsub.f32 %v223, %v1597
        %1599 = vmatpush1.msra.mxu0 %v1598
        %1600 = vmatprep.subr.mxu0 0.0
        %v1601 = vand.u32 %v224, 4294901760
        %v1602 = vsub.f32 %v224, %v1601
        %1603 = vmatpush1.msra.mxu0 %v1602
        %1604 = vmatprep.subr.mxu0 0.0
        %v1605 = vand.u32 %v225, 4294901760
        %v1606 = vsub.f32 %v225, %v1605
        %1607 = vmatpush1.msra.mxu0 %v1606
        %1608 = vmatprep.subr.mxu0 0.0
        %v1609 = vand.u32 %v226, 4294901760
        %v1610 = vsub.f32 %v226, %v1609
        %1611 = vmatpush1.msra.mxu0 %v1610
        %1612 = vmatprep.subr.mxu0 0.0
        %v1613 = vand.u32 %v227, 4294901760
        %v1614 = vsub.f32 %v227, %v1613
        %1615 = vmatpush1.msra.mxu0 %v1614
        %1616 = vmatprep.subr.mxu0 0.0
        %v1617 = vand.u32 %v228, 4294901760
        %v1618 = vsub.f32 %v228, %v1617
        %1619 = vmatpush1.msra.mxu0 %v1618
        %1620 = vmatprep.subr.mxu0 0.0
        %v1621 = vand.u32 %v229, 4294901760
        %v1622 = vsub.f32 %v229, %v1621
        %1623 = vmatpush1.msra.mxu0 %v1622
        %1624 = vmatprep.subr.mxu0 0.0
        %v1625 = vand.u32 %v230, 4294901760
        %v1626 = vsub.f32 %v230, %v1625
        %1627 = vmatpush1.msra.mxu0 %v1626
        %1628 = vmatprep.subr.mxu0 0.0
        %v1629 = vand.u32 %v231, 4294901760
        %v1630 = vsub.f32 %v231, %v1629
        %1631 = vmatpush1.msra.mxu0 %v1630
        %1632 = vmatprep.subr.mxu0 0.0
        %v1633 = vand.u32 %v232, 4294901760
        %v1634 = vsub.f32 %v232, %v1633
        %1635 = vmatpush1.msra.mxu0 %v1634
        %1636 = vmatprep.subr.mxu0 0.0
        %v1637 = vand.u32 %v233, 4294901760
        %v1638 = vsub.f32 %v233, %v1637
        %1639 = vmatpush1.msra.mxu0 %v1638
        %1640 = vmatprep.subr.mxu0 0.0
        %1641 = vmatpush1.msra.mxu0 0.0
        %1642 = vmatprep.subr.mxu0 0.0
        %1643 = vmatpush1.msra.mxu0 0.0
        %1644 = vmatprep.subr.mxu0 0.0
        %1645 = vmatpush1.msra.mxu0 0.0
        %1646 = vmatprep.subr.mxu0 0.0
        %1647 = vmatpush1.msra.mxu0 0.0
        %1648 = vmatprep.subr.mxu0 0.0
        %1649 = vmatpush1.msra.mxu0 0.0
        %1650 = vmatprep.subr.mxu0 0.0
        %1651 = vmatpush1.msra.mxu0 0.0
        %1652 = vmatprep.subr.mxu0 0.0
        %1653 = vmatpush1.msra.mxu0 0.0
        %1654 = vmatprep.subr.mxu0 0.0
        %1655 = vmatpush1.msra.mxu0 0.0
        %1656 = vmatprep.subr.mxu0 0.0
        %1657 = vmatpush1.msra.mxu0 0.0
        %1658 = vmatprep.subr.mxu0 0.0
        %1659 = vmatpush1.msra.mxu0 0.0
        %1660 = vmatprep.subr.mxu0 0.0
        %1661 = vmatpush1.msra.mxu0 0.0
        %1662 = vmatprep.subr.mxu0 0.0
        %1663 = vmatpush1.msra.mxu0 0.0
        %1664 = vmatprep.subr.mxu0 0.0
        %1665 = vmatpush1.msra.mxu0 0.0
        %1666 = vmatprep.subr.mxu0 0.0
        %1667 = vmatpush1.msra.mxu0 0.0
        %1668 = vmatprep.subr.mxu0 0.0
        %1669 = vmatpush1.msra.mxu0 0.0
        %1670 = vmatprep.subr.mxu0 0.0
        %1671 = vmatpush1.msra.mxu0 0.0
        %1672 = vmatprep.mubr.f32.mxu0 0.0
        %v1673 = vand.u32 %v1333, 4294901760
        %v1674 = vsub.f32 %v1333, %v1673
        %1675 = vmatmul.mubr.f32.gmra.mrb[0].mxu0 %v1674
        %v1676 = vpop.f32.mrb[0].mxu0
        %v1677 = vadd.f32 %v1573, %v1676
        %v1678 = vpop.f32.mrb[0].mxu0
        %1679 = vdwg.mxu0
        %1680 = vmatprep.subr.mxu0 0.0
        %v1681 = vand.u32 %v218, 4294901760
        %1682 = vmatpush1.msra.mxu0 %v1681
        %1683 = vmatprep.subr.mxu0 0.0
        %v1684 = vand.u32 %v219, 4294901760
        %1685 = vmatpush1.msra.mxu0 %v1684
        %1686 = vmatprep.subr.mxu0 0.0
        %v1687 = vand.u32 %v220, 4294901760
        %1688 = vmatpush1.msra.mxu0 %v1687
        %1689 = vmatprep.subr.mxu0 0.0
        %v1690 = vand.u32 %v221, 4294901760
        %1691 = vmatpush1.msra.mxu0 %v1690
        %1692 = vmatprep.subr.mxu0 0.0
        %v1693 = vand.u32 %v222, 4294901760
        %1694 = vmatpush1.msra.mxu0 %v1693
        %1695 = vmatprep.subr.mxu0 0.0
        %v1696 = vand.u32 %v223, 4294901760
        %1697 = vmatpush1.msra.mxu0 %v1696
        %1698 = vmatprep.subr.mxu0 0.0
        %v1699 = vand.u32 %v224, 4294901760
        %1700 = vmatpush1.msra.mxu0 %v1699
        %1701 = vmatprep.subr.mxu0 0.0
        %v1702 = vand.u32 %v225, 4294901760
        %1703 = vmatpush1.msra.mxu0 %v1702
        %1704 = vmatprep.subr.mxu0 0.0
        %v1705 = vand.u32 %v226, 4294901760
        %1706 = vmatpush1.msra.mxu0 %v1705
        %1707 = vmatprep.subr.mxu0 0.0
        %v1708 = vand.u32 %v227, 4294901760
        %1709 = vmatpush1.msra.mxu0 %v1708
        %1710 = vmatprep.subr.mxu0 0.0
        %v1711 = vand.u32 %v228, 4294901760
        %1712 = vmatpush1.msra.mxu0 %v1711
        %1713 = vmatprep.subr.mxu0 0.0
        %v1714 = vand.u32 %v229, 4294901760
        %1715 = vmatpush1.msra.mxu0 %v1714
        %1716 = vmatprep.subr.mxu0 0.0
        %v1717 = vand.u32 %v230, 4294901760
        %1718 = vmatpush1.msra.mxu0 %v1717
        %1719 = vmatprep.subr.mxu0 0.0
        %v1720 = vand.u32 %v231, 4294901760
        %1721 = vmatpush1.msra.mxu0 %v1720
        %1722 = vmatprep.subr.mxu0 0.0
        %v1723 = vand.u32 %v232, 4294901760
        %1724 = vmatpush1.msra.mxu0 %v1723
        %1725 = vmatprep.subr.mxu0 0.0
        %v1726 = vand.u32 %v233, 4294901760
        %1727 = vmatpush1.msra.mxu0 %v1726
        %1728 = vmatprep.subr.mxu0 0.0
        %1729 = vmatpush1.msra.mxu0 0.0
        %1730 = vmatprep.subr.mxu0 0.0
        %1731 = vmatpush1.msra.mxu0 0.0
        %1732 = vmatprep.subr.mxu0 0.0
        %1733 = vmatpush1.msra.mxu0 0.0
        %1734 = vmatprep.subr.mxu0 0.0
        %1735 = vmatpush1.msra.mxu0 0.0
        %1736 = vmatprep.subr.mxu0 0.0
        %1737 = vmatpush1.msra.mxu0 0.0
        %1738 = vmatprep.subr.mxu0 0.0
        %1739 = vmatpush1.msra.mxu0 0.0
        %1740 = vmatprep.subr.mxu0 0.0
        %1741 = vmatpush1.msra.mxu0 0.0
        %1742 = vmatprep.subr.mxu0 0.0
        %1743 = vmatpush1.msra.mxu0 0.0
        %1744 = vmatprep.subr.mxu0 0.0
        %1745 = vmatpush1.msra.mxu0 0.0
        %1746 = vmatprep.subr.mxu0 0.0
        %1747 = vmatpush1.msra.mxu0 0.0
        %1748 = vmatprep.subr.mxu0 0.0
        %1749 = vmatpush1.msra.mxu0 0.0
        %1750 = vmatprep.subr.mxu0 0.0
        %1751 = vmatpush1.msra.mxu0 0.0
        %1752 = vmatprep.subr.mxu0 0.0
        %1753 = vmatpush1.msra.mxu0 0.0
        %1754 = vmatprep.subr.mxu0 0.0
        %1755 = vmatpush1.msra.mxu0 0.0
        %1756 = vmatprep.subr.mxu0 0.0
        %1757 = vmatpush1.msra.mxu0 0.0
        %1758 = vmatprep.subr.mxu0 0.0
        %1759 = vmatpush1.msra.mxu0 0.0
        %1760 = vmatprep.mubr.f32.mxu0 0.0
        %v1761 = vand.u32 %v1333, 4294901760
        %v1762 = vsub.f32 %v1333, %v1761
        %v1763 = vand.u32 %v1762, 4294901760
        %1764 = vmatmul.mubr.f32.gmra.mrb[0].mxu0 %v1763
        %v1765 = vpop.f32.mrb[0].mxu0
        %v1766 = vadd.f32 %v1677, %v1765
        %v1767 = vpop.f32.mrb[0].mxu0
        %1768 = vdwg.mxu0
        %1769 = vmatprep.subr.mxu0 0.0
        %v1770 = vand.u32 %v218, 4294901760
        %v1771 = vsub.f32 %v218, %v1770
        %v1772 = vand.u32 %v1771, 4294901760
        %1773 = vmatpush1.msra.mxu0 %v1772
        %1774 = vmatprep.subr.mxu0 0.0
        %v1775 = vand.u32 %v219, 4294901760
        %v1776 = vsub.f32 %v219, %v1775
        %v1777 = vand.u32 %v1776, 4294901760
        %1778 = vmatpush1.msra.mxu0 %v1777
        %1779 = vmatprep.subr.mxu0 0.0
        %v1780 = vand.u32 %v220, 4294901760
        %v1781 = vsub.f32 %v220, %v1780
        %v1782 = vand.u32 %v1781, 4294901760
        %1783 = vmatpush1.msra.mxu0 %v1782
        %1784 = vmatprep.subr.mxu0 0.0
        %v1785 = vand.u32 %v221, 4294901760
        %v1786 = vsub.f32 %v221, %v1785
        %v1787 = vand.u32 %v1786, 4294901760
        %1788 = vmatpush1.msra.mxu0 %v1787
        %1789 = vmatprep.subr.mxu0 0.0
        %v1790 = vand.u32 %v222, 4294901760
        %v1791 = vsub.f32 %v222, %v1790
        %v1792 = vand.u32 %v1791, 4294901760
        %1793 = vmatpush1.msra.mxu0 %v1792
        %1794 = vmatprep.subr.mxu0 0.0
        %v1795 = vand.u32 %v223, 4294901760
        %v1796 = vsub.f32 %v223, %v1795
        %v1797 = vand.u32 %v1796, 4294901760
        %1798 = vmatpush1.msra.mxu0 %v1797
        %1799 = vmatprep.subr.mxu0 0.0
        %v1800 = vand.u32 %v224, 4294901760
        %v1801 = vsub.f32 %v224, %v1800
        %v1802 = vand.u32 %v1801, 4294901760
        %1803 = vmatpush1.msra.mxu0 %v1802
        %1804 = vmatprep.subr.mxu0 0.0
        %v1805 = vand.u32 %v225, 4294901760
        %v1806 = vsub.f32 %v225, %v1805
        %v1807 = vand.u32 %v1806, 4294901760
        %1808 = vmatpush1.msra.mxu0 %v1807
        %1809 = vmatprep.subr.mxu0 0.0
        %v1810 = vand.u32 %v226, 4294901760
        %v1811 = vsub.f32 %v226, %v1810
        %v1812 = vand.u32 %v1811, 4294901760
        %1813 = vmatpush1.msra.mxu0 %v1812
        %1814 = vmatprep.subr.mxu0 0.0
        %v1815 = vand.u32 %v227, 4294901760
        %v1816 = vsub.f32 %v227, %v1815
        %v1817 = vand.u32 %v1816, 4294901760
        %1818 = vmatpush1.msra.mxu0 %v1817
        %1819 = vmatprep.subr.mxu0 0.0
        %v1820 = vand.u32 %v228, 4294901760
        %v1821 = vsub.f32 %v228, %v1820
        %v1822 = vand.u32 %v1821, 4294901760
        %1823 = vmatpush1.msra.mxu0 %v1822
        %1824 = vmatprep.subr.mxu0 0.0
        %v1825 = vand.u32 %v229, 4294901760
        %v1826 = vsub.f32 %v229, %v1825
        %v1827 = vand.u32 %v1826, 4294901760
        %1828 = vmatpush1.msra.mxu0 %v1827
        %1829 = vmatprep.subr.mxu0 0.0
        %v1830 = vand.u32 %v230, 4294901760
        %v1831 = vsub.f32 %v230, %v1830
        %v1832 = vand.u32 %v1831, 4294901760
        %1833 = vmatpush1.msra.mxu0 %v1832
        %1834 = vmatprep.subr.mxu0 0.0
        %v1835 = vand.u32 %v231, 4294901760
        %v1836 = vsub.f32 %v231, %v1835
        %v1837 = vand.u32 %v1836, 4294901760
        %1838 = vmatpush1.msra.mxu0 %v1837
        %1839 = vmatprep.subr.mxu0 0.0
        %v1840 = vand.u32 %v232, 4294901760
        %v1841 = vsub.f32 %v232, %v1840
        %v1842 = vand.u32 %v1841, 4294901760
        %1843 = vmatpush1.msra.mxu0 %v1842
        %1844 = vmatprep.subr.mxu0 0.0
        %v1845 = vand.u32 %v233, 4294901760
        %v1846 = vsub.f32 %v233, %v1845
        %v1847 = vand.u32 %v1846, 4294901760
        %1848 = vmatpush1.msra.mxu0 %v1847
        %1849 = vmatprep.subr.mxu0 0.0
        %1850 = vmatpush1.msra.mxu0 0.0
        %1851 = vmatprep.subr.mxu0 0.0
        %1852 = vmatpush1.msra.mxu0 0.0
        %1853 = vmatprep.subr.mxu0 0.0
        %1854 = vmatpush1.msra.mxu0 0.0
        %1855 = vmatprep.subr.mxu0 0.0
        %1856 = vmatpush1.msra.mxu0 0.0
        %1857 = vmatprep.subr.mxu0 0.0
        %1858 = vmatpush1.msra.mxu0 0.0
        %1859 = vmatprep.subr.mxu0 0.0
        %1860 = vmatpush1.msra.mxu0 0.0
        %1861 = vmatprep.subr.mxu0 0.0
        %1862 = vmatpush1.msra.mxu0 0.0
        %1863 = vmatprep.subr.mxu0 0.0
        %1864 = vmatpush1.msra.mxu0 0.0
        %1865 = vmatprep.subr.mxu0 0.0
        %1866 = vmatpush1.msra.mxu0 0.0
        %1867 = vmatprep.subr.mxu0 0.0
        %1868 = vmatpush1.msra.mxu0 0.0
        %1869 = vmatprep.subr.mxu0 0.0
        %1870 = vmatpush1.msra.mxu0 0.0
        %1871 = vmatprep.subr.mxu0 0.0
        %1872 = vmatpush1.msra.mxu0 0.0
        %1873 = vmatprep.subr.mxu0 0.0
        %1874 = vmatpush1.msra.mxu0 0.0
        %1875 = vmatprep.subr.mxu0 0.0
        %1876 = vmatpush1.msra.mxu0 0.0
        %1877 = vmatprep.subr.mxu0 0.0
        %1878 = vmatpush1.msra.mxu0 0.0
        %1879 = vmatprep.subr.mxu0 0.0
        %1880 = vmatpush1.msra.mxu0 0.0
        %1881 = vmatprep.mubr.f32.mxu0 0.0
        %v1882 = vand.u32 %v1333, 4294901760
        %1883 = vmatmul.mubr.f32.gmra.mrb[0].mxu0 %v1882
        %v1884 = vpop.f32.mrb[0].mxu0
        %v1885 = vadd.f32 %v1766, %v1884
        %v1886 = vpop.f32.mrb[0].mxu0
        %1887 = vdwg.mxu0
        %1888 = vmatprep.subr.mxu0 0.0
        %v1889 = vand.u32 %v218, 4294901760
        %1890 = vmatpush1.msra.mxu0 %v1889
        %1891 = vmatprep.subr.mxu0 0.0
        %v1892 = vand.u32 %v219, 4294901760
        %1893 = vmatpush1.msra.mxu0 %v1892
        %1894 = vmatprep.subr.mxu0 0.0
        %v1895 = vand.u32 %v220, 4294901760
        %1896 = vmatpush1.msra.mxu0 %v1895
        %1897 = vmatprep.subr.mxu0 0.0
        %v1898 = vand.u32 %v221, 4294901760
        %1899 = vmatpush1.msra.mxu0 %v1898
        %1900 = vmatprep.subr.mxu0 0.0
        %v1901 = vand.u32 %v222, 4294901760
        %1902 = vmatpush1.msra.mxu0 %v1901
        %1903 = vmatprep.subr.mxu0 0.0
        %v1904 = vand.u32 %v223, 4294901760
        %1905 = vmatpush1.msra.mxu0 %v1904
        %1906 = vmatprep.subr.mxu0 0.0
        %v1907 = vand.u32 %v224, 4294901760
        %1908 = vmatpush1.msra.mxu0 %v1907
        %1909 = vmatprep.subr.mxu0 0.0
        %v1910 = vand.u32 %v225, 4294901760
        %1911 = vmatpush1.msra.mxu0 %v1910
        %1912 = vmatprep.subr.mxu0 0.0
        %v1913 = vand.u32 %v226, 4294901760
        %1914 = vmatpush1.msra.mxu0 %v1913
        %1915 = vmatprep.subr.mxu0 0.0
        %v1916 = vand.u32 %v227, 4294901760
        %1917 = vmatpush1.msra.mxu0 %v1916
        %1918 = vmatprep.subr.mxu0 0.0
        %v1919 = vand.u32 %v228, 4294901760
        %1920 = vmatpush1.msra.mxu0 %v1919
        %1921 = vmatprep.subr.mxu0 0.0
        %v1922 = vand.u32 %v229, 4294901760
        %1923 = vmatpush1.msra.mxu0 %v1922
        %1924 = vmatprep.subr.mxu0 0.0
        %v1925 = vand.u32 %v230, 4294901760
        %1926 = vmatpush1.msra.mxu0 %v1925
        %1927 = vmatprep.subr.mxu0 0.0
        %v1928 = vand.u32 %v231, 4294901760
        %1929 = vmatpush1.msra.mxu0 %v1928
        %1930 = vmatprep.subr.mxu0 0.0
        %v1931 = vand.u32 %v232, 4294901760
        %1932 = vmatpush1.msra.mxu0 %v1931
        %1933 = vmatprep.subr.mxu0 0.0
        %v1934 = vand.u32 %v233, 4294901760
        %1935 = vmatpush1.msra.mxu0 %v1934
        %1936 = vmatprep.subr.mxu0 0.0
        %1937 = vmatpush1.msra.mxu0 0.0
        %1938 = vmatprep.subr.mxu0 0.0
        %1939 = vmatpush1.msra.mxu0 0.0
        %1940 = vmatprep.subr.mxu0 0.0
        %1941 = vmatpush1.msra.mxu0 0.0
        %1942 = vmatprep.subr.mxu0 0.0
        %1943 = vmatpush1.msra.mxu0 0.0
        %1944 = vmatprep.subr.mxu0 0.0
        %1945 = vmatpush1.msra.mxu0 0.0
        %1946 = vmatprep.subr.mxu0 0.0
        %1947 = vmatpush1.msra.mxu0 0.0
        %1948 = vmatprep.subr.mxu0 0.0
        %1949 = vmatpush1.msra.mxu0 0.0
        %1950 = vmatprep.subr.mxu0 0.0
        %1951 = vmatpush1.msra.mxu0 0.0
        %1952 = vmatprep.subr.mxu0 0.0
        %1953 = vmatpush1.msra.mxu0 0.0
        %1954 = vmatprep.subr.mxu0 0.0
        %1955 = vmatpush1.msra.mxu0 0.0
        %1956 = vmatprep.subr.mxu0 0.0
        %1957 = vmatpush1.msra.mxu0 0.0
        %1958 = vmatprep.subr.mxu0 0.0
        %1959 = vmatpush1.msra.mxu0 0.0
        %1960 = vmatprep.subr.mxu0 0.0
        %1961 = vmatpush1.msra.mxu0 0.0
        %1962 = vmatprep.subr.mxu0 0.0
        %1963 = vmatpush1.msra.mxu0 0.0
        %1964 = vmatprep.subr.mxu0 0.0
        %1965 = vmatpush1.msra.mxu0 0.0
        %1966 = vmatprep.subr.mxu0 0.0
        %1967 = vmatpush1.msra.mxu0 0.0
        %1968 = vmatprep.mubr.f32.mxu0 0.0
        %v1969 = vand.u32 %v1333, 4294901760
        %1970 = vmatmul.mubr.f32.gmra.mrb[0].mxu0 %v1969
        %v1971 = vpop.f32.mrb[0].mxu0
        %v1972 = vadd.f32 %v1885, %v1971
        %v1973 = vpop.f32.mrb[0].mxu0
        %1974 = vdwg.mxu0
        %v1975 = vmul.f32 %v1333, %v1333
        %1976 = vmatprep.subr.mxu0 0.0
        %v1977 = vand.u32 %v218, 4294901760
        %1978 = vmatpush1.msra.mxu0 %v1977
        %1979 = vmatprep.subr.mxu0 0.0
        %v1980 = vand.u32 %v219, 4294901760
        %1981 = vmatpush1.msra.mxu0 %v1980
        %1982 = vmatprep.subr.mxu0 0.0
        %v1983 = vand.u32 %v220, 4294901760
        %1984 = vmatpush1.msra.mxu0 %v1983
        %1985 = vmatprep.subr.mxu0 0.0
        %v1986 = vand.u32 %v221, 4294901760
        %1987 = vmatpush1.msra.mxu0 %v1986
        %1988 = vmatprep.subr.mxu0 0.0
        %v1989 = vand.u32 %v222, 4294901760
        %1990 = vmatpush1.msra.mxu0 %v1989
        %1991 = vmatprep.subr.mxu0 0.0
        %v1992 = vand.u32 %v223, 4294901760
        %1993 = vmatpush1.msra.mxu0 %v1992
        %1994 = vmatprep.subr.mxu0 0.0
        %v1995 = vand.u32 %v224, 4294901760
        %1996 = vmatpush1.msra.mxu0 %v1995
        %1997 = vmatprep.subr.mxu0 0.0
        %v1998 = vand.u32 %v225, 4294901760
        %1999 = vmatpush1.msra.mxu0 %v1998
        %2000 = vmatprep.subr.mxu0 0.0
        %v2001 = vand.u32 %v226, 4294901760
        %2002 = vmatpush1.msra.mxu0 %v2001
        %2003 = vmatprep.subr.mxu0 0.0
        %v2004 = vand.u32 %v227, 4294901760
        %2005 = vmatpush1.msra.mxu0 %v2004
        %2006 = vmatprep.subr.mxu0 0.0
        %v2007 = vand.u32 %v228, 4294901760
        %2008 = vmatpush1.msra.mxu0 %v2007
        %2009 = vmatprep.subr.mxu0 0.0
        %v2010 = vand.u32 %v229, 4294901760
        %2011 = vmatpush1.msra.mxu0 %v2010
        %2012 = vmatprep.subr.mxu0 0.0
        %v2013 = vand.u32 %v230, 4294901760
        %2014 = vmatpush1.msra.mxu0 %v2013
        %2015 = vmatprep.subr.mxu0 0.0
        %v2016 = vand.u32 %v231, 4294901760
        %2017 = vmatpush1.msra.mxu0 %v2016
        %2018 = vmatprep.subr.mxu0 0.0
        %v2019 = vand.u32 %v232, 4294901760
        %2020 = vmatpush1.msra.mxu0 %v2019
        %2021 = vmatprep.subr.mxu0 0.0
        %v2022 = vand.u32 %v233, 4294901760
        %2023 = vmatpush1.msra.mxu0 %v2022
        %2024 = vmatprep.subr.mxu0 0.0
        %2025 = vmatpush1.msra.mxu0 0.0
        %2026 = vmatprep.subr.mxu0 0.0
        %2027 = vmatpush1.msra.mxu0 0.0
        %2028 = vmatprep.subr.mxu0 0.0
        %2029 = vmatpush1.msra.mxu0 0.0
        %2030 = vmatprep.subr.mxu0 0.0
        %2031 = vmatpush1.msra.mxu0 0.0
        %2032 = vmatprep.subr.mxu0 0.0
        %2033 = vmatpush1.msra.mxu0 0.0
        %2034 = vmatprep.subr.mxu0 0.0
        %2035 = vmatpush1.msra.mxu0 0.0
        %2036 = vmatprep.subr.mxu0 0.0
        %2037 = vmatpush1.msra.mxu0 0.0
        %2038 = vmatprep.subr.mxu0 0.0
        %2039 = vmatpush1.msra.mxu0 0.0
        %2040 = vmatprep.subr.mxu0 0.0
        %2041 = vmatpush1.msra.mxu0 0.0
        %2042 = vmatprep.subr.mxu0 0.0
        %2043 = vmatpush1.msra.mxu0 0.0
        %2044 = vmatprep.subr.mxu0 0.0
        %2045 = vmatpush1.msra.mxu0 0.0
        %2046 = vmatprep.subr.mxu0 0.0
        %2047 = vmatpush1.msra.mxu0 0.0
        %2048 = vmatprep.subr.mxu0 0.0
        %2049 = vmatpush1.msra.mxu0 0.0
        %2050 = vmatprep.subr.mxu0 0.0
        %2051 = vmatpush1.msra.mxu0 0.0
        %2052 = vmatprep.subr.mxu0 0.0
        %2053 = vmatpush1.msra.mxu0 0.0
        %2054 = vmatprep.subr.mxu0 0.0
        %2055 = vmatpush1.msra.mxu0 0.0
        %2056 = vmatprep.mubr.f32.mxu0 0.0
        %v2057 = vand.u32 %v1975, 4294901760
        %v2058 = vsub.f32 %v1975, %v2057
        %v2059 = vand.u32 %v2058, 4294901760
        %v2060 = vsub.f32 %v2058, %v2059
        %v2061 = vand.u32 %v2060, 4294901760
        %2062 = vmatmul.mubr.f32.gmra.mrb[0].mxu0 %v2061
        %v2063 = vpop.f32.mrb[0].mxu0
        %v2064 = vadd.f32 0.0, %v2063
        %v2065 = vpop.f32.mrb[0].mxu0
        %2066 = vdwg.mxu0
        %2067 = vmatprep.subr.mxu0 0.0
        %v2068 = vand.u32 %v218, 4294901760
        %v2069 = vsub.f32 %v218, %v2068
        %v2070 = vand.u32 %v2069, 4294901760
        %v2071 = vsub.f32 %v2069, %v2070
        %v2072 = vand.u32 %v2071, 4294901760
        %2073 = vmatpush1.msra.mxu0 %v2072
        %2074 = vmatprep.subr.mxu0 0.0
        %v2075 = vand.u32 %v219, 4294901760
        %v2076 = vsub.f32 %v219, %v2075
        %v2077 = vand.u32 %v2076, 4294901760
        %v2078 = vsub.f32 %v2076, %v2077
        %v2079 = vand.u32 %v2078, 4294901760
        %2080 = vmatpush1.msra.mxu0 %v2079
        %2081 = vmatprep.subr.mxu0 0.0
        %v2082 = vand.u32 %v220, 4294901760
        %v2083 = vsub.f32 %v220, %v2082
        %v2084 = vand.u32 %v2083, 4294901760
        %v2085 = vsub.f32 %v2083, %v2084
        %v2086 = vand.u32 %v2085, 4294901760
        %2087 = vmatpush1.msra.mxu0 %v2086
        %2088 = vmatprep.subr.mxu0 0.0
        %v2089 = vand.u32 %v221, 4294901760
        %v2090 = vsub.f32 %v221, %v2089
        %v2091 = vand.u32 %v2090, 4294901760
        %v2092 = vsub.f32 %v2090, %v2091
        %v2093 = vand.u32 %v2092, 4294901760
        %2094 = vmatpush1.msra.mxu0 %v2093
        %2095 = vmatprep.subr.mxu0 0.0
        %v2096 = vand.u32 %v222, 4294901760
        %v2097 = vsub.f32 %v222, %v2096
        %v2098 = vand.u32 %v2097, 4294901760
        %v2099 = vsub.f32 %v2097, %v2098
        %v2100 = vand.u32 %v2099, 4294901760
        %2101 = vmatpush1.msra.mxu0 %v2100
        %2102 = vmatprep.subr.mxu0 0.0
        %v2103 = vand.u32 %v223, 4294901760
        %v2104 = vsub.f32 %v223, %v2103
        %v2105 = vand.u32 %v2104, 4294901760
        %v2106 = vsub.f32 %v2104, %v2105
        %v2107 = vand.u32 %v2106, 4294901760
        %2108 = vmatpush1.msra.mxu0 %v2107
        %2109 = vmatprep.subr.mxu0 0.0
        %v2110 = vand.u32 %v224, 4294901760
        %v2111 = vsub.f32 %v224, %v2110
        %v2112 = vand.u32 %v2111, 4294901760
        %v2113 = vsub.f32 %v2111, %v2112
        %v2114 = vand.u32 %v2113, 4294901760
        %2115 = vmatpush1.msra.mxu0 %v2114
        %2116 = vmatprep.subr.mxu0 0.0
        %v2117 = vand.u32 %v225, 4294901760
        %v2118 = vsub.f32 %v225, %v2117
        %v2119 = vand.u32 %v2118, 4294901760
        %v2120 = vsub.f32 %v2118, %v2119
        %v2121 = vand.u32 %v2120, 4294901760
        %2122 = vmatpush1.msra.mxu0 %v2121
        %2123 = vmatprep.subr.mxu0 0.0
        %v2124 = vand.u32 %v226, 4294901760
        %v2125 = vsub.f32 %v226, %v2124
        %v2126 = vand.u32 %v2125, 4294901760
        %v2127 = vsub.f32 %v2125, %v2126
        %v2128 = vand.u32 %v2127, 4294901760
        %2129 = vmatpush1.msra.mxu0 %v2128
        %2130 = vmatprep.subr.mxu0 0.0
        %v2131 = vand.u32 %v227, 4294901760
        %v2132 = vsub.f32 %v227, %v2131
        %v2133 = vand.u32 %v2132, 4294901760
        %v2134 = vsub.f32 %v2132, %v2133
        %v2135 = vand.u32 %v2134, 4294901760
        %2136 = vmatpush1.msra.mxu0 %v2135
        %2137 = vmatprep.subr.mxu0 0.0
        %v2138 = vand.u32 %v228, 4294901760
        %v2139 = vsub.f32 %v228, %v2138
        %v2140 = vand.u32 %v2139, 4294901760
        %v2141 = vsub.f32 %v2139, %v2140
        %v2142 = vand.u32 %v2141, 4294901760
        %2143 = vmatpush1.msra.mxu0 %v2142
        %2144 = vmatprep.subr.mxu0 0.0
        %v2145 = vand.u32 %v229, 4294901760
        %v2146 = vsub.f32 %v229, %v2145
        %v2147 = vand.u32 %v2146, 4294901760
        %v2148 = vsub.f32 %v2146, %v2147
        %v2149 = vand.u32 %v2148, 4294901760
        %2150 = vmatpush1.msra.mxu0 %v2149
        %2151 = vmatprep.subr.mxu0 0.0
        %v2152 = vand.u32 %v230, 4294901760
        %v2153 = vsub.f32 %v230, %v2152
        %v2154 = vand.u32 %v2153, 4294901760
        %v2155 = vsub.f32 %v2153, %v2154
        %v2156 = vand.u32 %v2155, 4294901760
        %2157 = vmatpush1.msra.mxu0 %v2156
        %2158 = vmatprep.subr.mxu0 0.0
        %v2159 = vand.u32 %v231, 4294901760
        %v2160 = vsub.f32 %v231, %v2159
        %v2161 = vand.u32 %v2160, 4294901760
        %v2162 = vsub.f32 %v2160, %v2161
        %v2163 = vand.u32 %v2162, 4294901760
        %2164 = vmatpush1.msra.mxu0 %v2163
        %2165 = vmatprep.subr.mxu0 0.0
        %v2166 = vand.u32 %v232, 4294901760
        %v2167 = vsub.f32 %v232, %v2166
        %v2168 = vand.u32 %v2167, 4294901760
        %v2169 = vsub.f32 %v2167, %v2168
        %v2170 = vand.u32 %v2169, 4294901760
        %2171 = vmatpush1.msra.mxu0 %v2170
        %2172 = vmatprep.subr.mxu0 0.0
        %v2173 = vand.u32 %v233, 4294901760
        %v2174 = vsub.f32 %v233, %v2173
        %v2175 = vand.u32 %v2174, 4294901760
        %v2176 = vsub.f32 %v2174, %v2175
        %v2177 = vand.u32 %v2176, 4294901760
        %2178 = vmatpush1.msra.mxu0 %v2177
        %2179 = vmatprep.subr.mxu0 0.0
        %2180 = vmatpush1.msra.mxu0 0.0
        %2181 = vmatprep.subr.mxu0 0.0
        %2182 = vmatpush1.msra.mxu0 0.0
        %2183 = vmatprep.subr.mxu0 0.0
        %2184 = vmatpush1.msra.mxu0 0.0
        %2185 = vmatprep.subr.mxu0 0.0
        %2186 = vmatpush1.msra.mxu0 0.0
        %2187 = vmatprep.subr.mxu0 0.0
        %2188 = vmatpush1.msra.mxu0 0.0
        %2189 = vmatprep.subr.mxu0 0.0
        %2190 = vmatpush1.msra.mxu0 0.0
        %2191 = vmatprep.subr.mxu0 0.0
        %2192 = vmatpush1.msra.mxu0 0.0
        %2193 = vmatprep.subr.mxu0 0.0
        %2194 = vmatpush1.msra.mxu0 0.0
        %2195 = vmatprep.subr.mxu0 0.0
        %2196 = vmatpush1.msra.mxu0 0.0
        %2197 = vmatprep.subr.mxu0 0.0
        %2198 = vmatpush1.msra.mxu0 0.0
        %2199 = vmatprep.subr.mxu0 0.0
        %2200 = vmatpush1.msra.mxu0 0.0
        %2201 = vmatprep.subr.mxu0 0.0
        %2202 = vmatpush1.msra.mxu0 0.0
        %2203 = vmatprep.subr.mxu0 0.0
        %2204 = vmatpush1.msra.mxu0 0.0
        %2205 = vmatprep.subr.mxu0 0.0
        %2206 = vmatpush1.msra.mxu0 0.0
        %2207 = vmatprep.subr.mxu0 0.0
        %2208 = vmatpush1.msra.mxu0 0.0
        %2209 = vmatprep.subr.mxu0 0.0
        %2210 = vmatpush1.msra.mxu0 0.0
        %2211 = vmatprep.mubr.f32.mxu0 0.0
        %v2212 = vand.u32 %v1975, 4294901760
        %2213 = vmatmul.mubr.f32.gmra.mrb[0].mxu0 %v2212
        %v2214 = vpop.f32.mrb[0].mxu0
        %v2215 = vadd.f32 %v2064, %v2214
        %v2216 = vpop.f32.mrb[0].mxu0
        %2217 = vdwg.mxu0
        %2218 = vmatprep.subr.mxu0 0.0
        %v2219 = vand.u32 %v218, 4294901760
        %v2220 = vsub.f32 %v218, %v2219
        %2221 = vmatpush1.msra.mxu0 %v2220
        %2222 = vmatprep.subr.mxu0 0.0
        %v2223 = vand.u32 %v219, 4294901760
        %v2224 = vsub.f32 %v219, %v2223
        %2225 = vmatpush1.msra.mxu0 %v2224
        %2226 = vmatprep.subr.mxu0 0.0
        %v2227 = vand.u32 %v220, 4294901760
        %v2228 = vsub.f32 %v220, %v2227
        %2229 = vmatpush1.msra.mxu0 %v2228
        %2230 = vmatprep.subr.mxu0 0.0
        %v2231 = vand.u32 %v221, 4294901760
        %v2232 = vsub.f32 %v221, %v2231
        %2233 = vmatpush1.msra.mxu0 %v2232
        %2234 = vmatprep.subr.mxu0 0.0
        %v2235 = vand.u32 %v222, 4294901760
        %v2236 = vsub.f32 %v222, %v2235
        %2237 = vmatpush1.msra.mxu0 %v2236
        %2238 = vmatprep.subr.mxu0 0.0
        %v2239 = vand.u32 %v223, 4294901760
        %v2240 = vsub.f32 %v223, %v2239
        %2241 = vmatpush1.msra.mxu0 %v2240
        %2242 = vmatprep.subr.mxu0 0.0
        %v2243 = vand.u32 %v224, 4294901760
        %v2244 = vsub.f32 %v224, %v2243
        %2245 = vmatpush1.msra.mxu0 %v2244
        %2246 = vmatprep.subr.mxu0 0.0
        %v2247 = vand.u32 %v225, 4294901760
        %v2248 = vsub.f32 %v225, %v2247
        %2249 = vmatpush1.msra.mxu0 %v2248
        %2250 = vmatprep.subr.mxu0 0.0
        %v2251 = vand.u32 %v226, 4294901760
        %v2252 = vsub.f32 %v226, %v2251
        %2253 = vmatpush1.msra.mxu0 %v2252
        %2254 = vmatprep.subr.mxu0 0.0
        %v2255 = vand.u32 %v227, 4294901760
        %v2256 = vsub.f32 %v227, %v2255
        %2257 = vmatpush1.msra.mxu0 %v2256
        %2258 = vmatprep.subr.mxu0 0.0
        %v2259 = vand.u32 %v228, 4294901760
        %v2260 = vsub.f32 %v228, %v2259
        %2261 = vmatpush1.msra.mxu0 %v2260
        %2262 = vmatprep.subr.mxu0 0.0
        %v2263 = vand.u32 %v229, 4294901760
        %v2264 = vsub.f32 %v229, %v2263
        %2265 = vmatpush1.msra.mxu0 %v2264
        %2266 = vmatprep.subr.mxu0 0.0
        %v2267 = vand.u32 %v230, 4294901760
        %v2268 = vsub.f32 %v230, %v2267
        %2269 = vmatpush1.msra.mxu0 %v2268
        %2270 = vmatprep.subr.mxu0 0.0
        %v2271 = vand.u32 %v231, 4294901760
        %v2272 = vsub.f32 %v231, %v2271
        %2273 = vmatpush1.msra.mxu0 %v2272
        %2274 = vmatprep.subr.mxu0 0.0
        %v2275 = vand.u32 %v232, 4294901760
        %v2276 = vsub.f32 %v232, %v2275
        %2277 = vmatpush1.msra.mxu0 %v2276
        %2278 = vmatprep.subr.mxu0 0.0
        %v2279 = vand.u32 %v233, 4294901760
        %v2280 = vsub.f32 %v233, %v2279
        %2281 = vmatpush1.msra.mxu0 %v2280
        %2282 = vmatprep.subr.mxu0 0.0
        %2283 = vmatpush1.msra.mxu0 0.0
        %2284 = vmatprep.subr.mxu0 0.0
        %2285 = vmatpush1.msra.mxu0 0.0
        %2286 = vmatprep.subr.mxu0 0.0
        %2287 = vmatpush1.msra.mxu0 0.0
        %2288 = vmatprep.subr.mxu0 0.0
        %2289 = vmatpush1.msra.mxu0 0.0
        %2290 = vmatprep.subr.mxu0 0.0
        %2291 = vmatpush1.msra.mxu0 0.0
        %2292 = vmatprep.subr.mxu0 0.0
        %2293 = vmatpush1.msra.mxu0 0.0
        %2294 = vmatprep.subr.mxu0 0.0
        %2295 = vmatpush1.msra.mxu0 0.0
        %2296 = vmatprep.subr.mxu0 0.0
        %2297 = vmatpush1.msra.mxu0 0.0
        %2298 = vmatprep.subr.mxu0 0.0
        %2299 = vmatpush1.msra.mxu0 0.0
        %2300 = vmatprep.subr.mxu0 0.0
        %2301 = vmatpush1.msra.mxu0 0.0
        %2302 = vmatprep.subr.mxu0 0.0
        %2303 = vmatpush1.msra.mxu0 0.0
        %2304 = vmatprep.subr.mxu0 0.0
        %2305 = vmatpush1.msra.mxu0 0.0
        %2306 = vmatprep.subr.mxu0 0.0
        %2307 = vmatpush1.msra.mxu0 0.0
        %2308 = vmatprep.subr.mxu0 0.0
        %2309 = vmatpush1.msra.mxu0 0.0
        %2310 = vmatprep.subr.mxu0 0.0
        %2311 = vmatpush1.msra.mxu0 0.0
        %2312 = vmatprep.subr.mxu0 0.0
        %2313 = vmatpush1.msra.mxu0 0.0
        %2314 = vmatprep.mubr.f32.mxu0 0.0
        %v2315 = vand.u32 %v1975, 4294901760
        %v2316 = vsub.f32 %v1975, %v2315
        %2317 = vmatmul.mubr.f32.gmra.mrb[0].mxu0 %v2316
        %v2318 = vpop.f32.mrb[0].mxu0
        %v2319 = vadd.f32 %v2215, %v2318
        %v2320 = vpop.f32.mrb[0].mxu0
        %2321 = vdwg.mxu0
        %2322 = vmatprep.subr.mxu0 0.0
        %v2323 = vand.u32 %v218, 4294901760
        %2324 = vmatpush1.msra.mxu0 %v2323
        %2325 = vmatprep.subr.mxu0 0.0
        %v2326 = vand.u32 %v219, 4294901760
        %2327 = vmatpush1.msra.mxu0 %v2326
        %2328 = vmatprep.subr.mxu0 0.0
        %v2329 = vand.u32 %v220, 4294901760
        %2330 = vmatpush1.msra.mxu0 %v2329
        %2331 = vmatprep.subr.mxu0 0.0
        %v2332 = vand.u32 %v221, 4294901760
        %2333 = vmatpush1.msra.mxu0 %v2332
        %2334 = vmatprep.subr.mxu0 0.0
        %v2335 = vand.u32 %v222, 4294901760
        %2336 = vmatpush1.msra.mxu0 %v2335
        %2337 = vmatprep.subr.mxu0 0.0
        %v2338 = vand.u32 %v223, 4294901760
        %2339 = vmatpush1.msra.mxu0 %v2338
        %2340 = vmatprep.subr.mxu0 0.0
        %v2341 = vand.u32 %v224, 4294901760
        %2342 = vmatpush1.msra.mxu0 %v2341
        %2343 = vmatprep.subr.mxu0 0.0
        %v2344 = vand.u32 %v225, 4294901760
        %2345 = vmatpush1.msra.mxu0 %v2344
        %2346 = vmatprep.subr.mxu0 0.0
        %v2347 = vand.u32 %v226, 4294901760
        %2348 = vmatpush1.msra.mxu0 %v2347
        %2349 = vmatprep.subr.mxu0 0.0
        %v2350 = vand.u32 %v227, 4294901760
        %2351 = vmatpush1.msra.mxu0 %v2350
        %2352 = vmatprep.subr.mxu0 0.0
        %v2353 = vand.u32 %v228, 4294901760
        %2354 = vmatpush1.msra.mxu0 %v2353
        %2355 = vmatprep.subr.mxu0 0.0
        %v2356 = vand.u32 %v229, 4294901760
        %2357 = vmatpush1.msra.mxu0 %v2356
        %2358 = vmatprep.subr.mxu0 0.0
        %v2359 = vand.u32 %v230, 4294901760
        %2360 = vmatpush1.msra.mxu0 %v2359
        %2361 = vmatprep.subr.mxu0 0.0
        %v2362 = vand.u32 %v231, 4294901760
        %2363 = vmatpush1.msra.mxu0 %v2362
        %2364 = vmatprep.subr.mxu0 0.0
        %v2365 = vand.u32 %v232, 4294901760
        %2366 = vmatpush1.msra.mxu0 %v2365
        %2367 = vmatprep.subr.mxu0 0.0
        %v2368 = vand.u32 %v233, 4294901760
        %2369 = vmatpush1.msra.mxu0 %v2368
        %2370 = vmatprep.subr.mxu0 0.0
        %2371 = vmatpush1.msra.mxu0 0.0
        %2372 = vmatprep.subr.mxu0 0.0
        %2373 = vmatpush1.msra.mxu0 0.0
        %2374 = vmatprep.subr.mxu0 0.0
        %2375 = vmatpush1.msra.mxu0 0.0
        %2376 = vmatprep.subr.mxu0 0.0
        %2377 = vmatpush1.msra.mxu0 0.0
        %2378 = vmatprep.subr.mxu0 0.0
        %2379 = vmatpush1.msra.mxu0 0.0
        %2380 = vmatprep.subr.mxu0 0.0
        %2381 = vmatpush1.msra.mxu0 0.0
        %2382 = vmatprep.subr.mxu0 0.0
        %2383 = vmatpush1.msra.mxu0 0.0
        %2384 = vmatprep.subr.mxu0 0.0
        %2385 = vmatpush1.msra.mxu0 0.0
        %2386 = vmatprep.subr.mxu0 0.0
        %2387 = vmatpush1.msra.mxu0 0.0
        %2388 = vmatprep.subr.mxu0 0.0
        %2389 = vmatpush1.msra.mxu0 0.0
        %2390 = vmatprep.subr.mxu0 0.0
        %2391 = vmatpush1.msra.mxu0 0.0
        %2392 = vmatprep.subr.mxu0 0.0
        %2393 = vmatpush1.msra.mxu0 0.0
        %2394 = vmatprep.subr.mxu0 0.0
        %2395 = vmatpush1.msra.mxu0 0.0
        %2396 = vmatprep.subr.mxu0 0.0
        %2397 = vmatpush1.msra.mxu0 0.0
        %2398 = vmatprep.subr.mxu0 0.0
        %2399 = vmatpush1.msra.mxu0 0.0
        %2400 = vmatprep.subr.mxu0 0.0
        %2401 = vmatpush1.msra.mxu0 0.0
        %2402 = vmatprep.mubr.f32.mxu0 0.0
        %v2403 = vand.u32 %v1975, 4294901760
        %v2404 = vsub.f32 %v1975, %v2403
        %v2405 = vand.u32 %v2404, 4294901760
        %2406 = vmatmul.mubr.f32.gmra.mrb[0].mxu0 %v2405
        %v2407 = vpop.f32.mrb[0].mxu0
        %v2408 = vadd.f32 %v2319, %v2407
        %v2409 = vpop.f32.mrb[0].mxu0
        %2410 = vdwg.mxu0
        %2411 = vmatprep.subr.mxu0 0.0
        %v2412 = vand.u32 %v218, 4294901760
        %v2413 = vsub.f32 %v218, %v2412
        %v2414 = vand.u32 %v2413, 4294901760
        %2415 = vmatpush1.msra.mxu0 %v2414
        %2416 = vmatprep.subr.mxu0 0.0
        %v2417 = vand.u32 %v219, 4294901760
        %v2418 = vsub.f32 %v219, %v2417
        %v2419 = vand.u32 %v2418, 4294901760
        %2420 = vmatpush1.msra.mxu0 %v2419
        %2421 = vmatprep.subr.mxu0 0.0
        %v2422 = vand.u32 %v220, 4294901760
        %v2423 = vsub.f32 %v220, %v2422
        %v2424 = vand.u32 %v2423, 4294901760
        %2425 = vmatpush1.msra.mxu0 %v2424
        %2426 = vmatprep.subr.mxu0 0.0
        %v2427 = vand.u32 %v221, 4294901760
        %v2428 = vsub.f32 %v221, %v2427
        %v2429 = vand.u32 %v2428, 4294901760
        %2430 = vmatpush1.msra.mxu0 %v2429
        %2431 = vmatprep.subr.mxu0 0.0
        %v2432 = vand.u32 %v222, 4294901760
        %v2433 = vsub.f32 %v222, %v2432
        %v2434 = vand.u32 %v2433, 4294901760
        %2435 = vmatpush1.msra.mxu0 %v2434
        %2436 = vmatprep.subr.mxu0 0.0
        %v2437 = vand.u32 %v223, 4294901760
        %v2438 = vsub.f32 %v223, %v2437
        %v2439 = vand.u32 %v2438, 4294901760
        %2440 = vmatpush1.msra.mxu0 %v2439
        %2441 = vmatprep.subr.mxu0 0.0
        %v2442 = vand.u32 %v224, 4294901760
        %v2443 = vsub.f32 %v224, %v2442
        %v2444 = vand.u32 %v2443, 4294901760
        %2445 = vmatpush1.msra.mxu0 %v2444
        %2446 = vmatprep.subr.mxu0 0.0
        %v2447 = vand.u32 %v225, 4294901760
        %v2448 = vsub.f32 %v225, %v2447
        %v2449 = vand.u32 %v2448, 4294901760
        %2450 = vmatpush1.msra.mxu0 %v2449
        %2451 = vmatprep.subr.mxu0 0.0
        %v2452 = vand.u32 %v226, 4294901760
        %v2453 = vsub.f32 %v226, %v2452
        %v2454 = vand.u32 %v2453, 4294901760
        %2455 = vmatpush1.msra.mxu0 %v2454
        %2456 = vmatprep.subr.mxu0 0.0
        %v2457 = vand.u32 %v227, 4294901760
        %v2458 = vsub.f32 %v227, %v2457
        %v2459 = vand.u32 %v2458, 4294901760
        %2460 = vmatpush1.msra.mxu0 %v2459
        %2461 = vmatprep.subr.mxu0 0.0
        %v2462 = vand.u32 %v228, 4294901760
        %v2463 = vsub.f32 %v228, %v2462
        %v2464 = vand.u32 %v2463, 4294901760
        %2465 = vmatpush1.msra.mxu0 %v2464
        %2466 = vmatprep.subr.mxu0 0.0
        %v2467 = vand.u32 %v229, 4294901760
        %v2468 = vsub.f32 %v229, %v2467
        %v2469 = vand.u32 %v2468, 4294901760
        %2470 = vmatpush1.msra.mxu0 %v2469
        %2471 = vmatprep.subr.mxu0 0.0
        %v2472 = vand.u32 %v230, 4294901760
        %v2473 = vsub.f32 %v230, %v2472
        %v2474 = vand.u32 %v2473, 4294901760
        %2475 = vmatpush1.msra.mxu0 %v2474
        %2476 = vmatprep.subr.mxu0 0.0
        %v2477 = vand.u32 %v231, 4294901760
        %v2478 = vsub.f32 %v231, %v2477
        %v2479 = vand.u32 %v2478, 4294901760
        %2480 = vmatpush1.msra.mxu0 %v2479
        %2481 = vmatprep.subr.mxu0 0.0
        %v2482 = vand.u32 %v232, 4294901760
        %v2483 = vsub.f32 %v232, %v2482
        %v2484 = vand.u32 %v2483, 4294901760
        %2485 = vmatpush1.msra.mxu0 %v2484
        %2486 = vmatprep.subr.mxu0 0.0
        %v2487 = vand.u32 %v233, 4294901760
        %v2488 = vsub.f32 %v233, %v2487
        %v2489 = vand.u32 %v2488, 4294901760
        %2490 = vmatpush1.msra.mxu0 %v2489
        %2491 = vmatprep.subr.mxu0 0.0
        %2492 = vmatpush1.msra.mxu0 0.0
        %2493 = vmatprep.subr.mxu0 0.0
        %2494 = vmatpush1.msra.mxu0 0.0
        %2495 = vmatprep.subr.mxu0 0.0
        %2496 = vmatpush1.msra.mxu0 0.0
        %2497 = vmatprep.subr.mxu0 0.0
        %2498 = vmatpush1.msra.mxu0 0.0
        %2499 = vmatprep.subr.mxu0 0.0
        %2500 = vmatpush1.msra.mxu0 0.0
        %2501 = vmatprep.subr.mxu0 0.0
        %2502 = vmatpush1.msra.mxu0 0.0
        %2503 = vmatprep.subr.mxu0 0.0
        %2504 = vmatpush1.msra.mxu0 0.0
        %2505 = vmatprep.subr.mxu0 0.0
        %2506 = vmatpush1.msra.mxu0 0.0
        %2507 = vmatprep.subr.mxu0 0.0
        %2508 = vmatpush1.msra.mxu0 0.0
        %2509 = vmatprep.subr.mxu0 0.0
        %2510 = vmatpush1.msra.mxu0 0.0
        %2511 = vmatprep.subr.mxu0 0.0
        %2512 = vmatpush1.msra.mxu0 0.0
        %2513 = vmatprep.subr.mxu0 0.0
        %2514 = vmatpush1.msra.mxu0 0.0
        %2515 = vmatprep.subr.mxu0 0.0
        %2516 = vmatpush1.msra.mxu0 0.0
        %2517 = vmatprep.subr.mxu0 0.0
        %2518 = vmatpush1.msra.mxu0 0.0
        %2519 = vmatprep.subr.mxu0 0.0
        %2520 = vmatpush1.msra.mxu0 0.0
        %2521 = vmatprep.subr.mxu0 0.0
        %2522 = vmatpush1.msra.mxu0 0.0
        %2523 = vmatprep.mubr.f32.mxu0 0.0
        %v2524 = vand.u32 %v1975, 4294901760
        %2525 = vmatmul.mubr.f32.gmra.mrb[0].mxu0 %v2524
        %v2526 = vpop.f32.mrb[0].mxu0
        %v2527 = vadd.f32 %v2408, %v2526
        %v2528 = vpop.f32.mrb[0].mxu0
        %2529 = vdwg.mxu0
        %2530 = vmatprep.subr.mxu0 0.0
        %v2531 = vand.u32 %v218, 4294901760
        %2532 = vmatpush1.msra.mxu0 %v2531
        %2533 = vmatprep.subr.mxu0 0.0
        %v2534 = vand.u32 %v219, 4294901760
        %2535 = vmatpush1.msra.mxu0 %v2534
        %2536 = vmatprep.subr.mxu0 0.0
        %v2537 = vand.u32 %v220, 4294901760
        %2538 = vmatpush1.msra.mxu0 %v2537
        %2539 = vmatprep.subr.mxu0 0.0
        %v2540 = vand.u32 %v221, 4294901760
        %2541 = vmatpush1.msra.mxu0 %v2540
        %2542 = vmatprep.subr.mxu0 0.0
        %v2543 = vand.u32 %v222, 4294901760
        %2544 = vmatpush1.msra.mxu0 %v2543
        %2545 = vmatprep.subr.mxu0 0.0
        %v2546 = vand.u32 %v223, 4294901760
        %2547 = vmatpush1.msra.mxu0 %v2546
        %2548 = vmatprep.subr.mxu0 0.0
        %v2549 = vand.u32 %v224, 4294901760
        %2550 = vmatpush1.msra.mxu0 %v2549
        %2551 = vmatprep.subr.mxu0 0.0
        %v2552 = vand.u32 %v225, 4294901760
        %2553 = vmatpush1.msra.mxu0 %v2552
        %2554 = vmatprep.subr.mxu0 0.0
        %v2555 = vand.u32 %v226, 4294901760
        %2556 = vmatpush1.msra.mxu0 %v2555
        %2557 = vmatprep.subr.mxu0 0.0
        %v2558 = vand.u32 %v227, 4294901760
        %2559 = vmatpush1.msra.mxu0 %v2558
        %2560 = vmatprep.subr.mxu0 0.0
        %v2561 = vand.u32 %v228, 4294901760
        %2562 = vmatpush1.msra.mxu0 %v2561
        %2563 = vmatprep.subr.mxu0 0.0
        %v2564 = vand.u32 %v229, 4294901760
        %2565 = vmatpush1.msra.mxu0 %v2564
        %2566 = vmatprep.subr.mxu0 0.0
        %v2567 = vand.u32 %v230, 4294901760
        %2568 = vmatpush1.msra.mxu0 %v2567
        %2569 = vmatprep.subr.mxu0 0.0
        %v2570 = vand.u32 %v231, 4294901760
        %2571 = vmatpush1.msra.mxu0 %v2570
        %2572 = vmatprep.subr.mxu0 0.0
        %v2573 = vand.u32 %v232, 4294901760
        %2574 = vmatpush1.msra.mxu0 %v2573
        %2575 = vmatprep.subr.mxu0 0.0
        %v2576 = vand.u32 %v233, 4294901760
        %2577 = vmatpush1.msra.mxu0 %v2576
        %2578 = vmatprep.subr.mxu0 0.0
        %2579 = vmatpush1.msra.mxu0 0.0
        %2580 = vmatprep.subr.mxu0 0.0
        %2581 = vmatpush1.msra.mxu0 0.0
        %2582 = vmatprep.subr.mxu0 0.0
        %2583 = vmatpush1.msra.mxu0 0.0
        %2584 = vmatprep.subr.mxu0 0.0
        %2585 = vmatpush1.msra.mxu0 0.0
        %2586 = vmatprep.subr.mxu0 0.0
        %2587 = vmatpush1.msra.mxu0 0.0
        %2588 = vmatprep.subr.mxu0 0.0
        %2589 = vmatpush1.msra.mxu0 0.0
        %2590 = vmatprep.subr.mxu0 0.0
        %2591 = vmatpush1.msra.mxu0 0.0
        %2592 = vmatprep.subr.mxu0 0.0
        %2593 = vmatpush1.msra.mxu0 0.0
        %2594 = vmatprep.subr.mxu0 0.0
        %2595 = vmatpush1.msra.mxu0 0.0
        %2596 = vmatprep.subr.mxu0 0.0
        %2597 = vmatpush1.msra.mxu0 0.0
        %2598 = vmatprep.subr.mxu0 0.0
        %2599 = vmatpush1.msra.mxu0 0.0
        %2600 = vmatprep.subr.mxu0 0.0
        %2601 = vmatpush1.msra.mxu0 0.0
        %2602 = vmatprep.subr.mxu0 0.0
        %2603 = vmatpush1.msra.mxu0 0.0
        %2604 = vmatprep.subr.mxu0 0.0
        %2605 = vmatpush1.msra.mxu0 0.0
        %2606 = vmatprep.subr.mxu0 0.0
        %2607 = vmatpush1.msra.mxu0 0.0
        %2608 = vmatprep.subr.mxu0 0.0
        %2609 = vmatpush1.msra.mxu0 0.0
        %2610 = vmatprep.mubr.f32.mxu0 0.0
        %v2611 = vand.u32 %v1975, 4294901760
        %2612 = vmatmul.mubr.f32.gmra.mrb[0].mxu0 %v2611
        %v2613 = vpop.f32.mrb[0].mxu0
        %v2614 = vadd.f32 %v2527, %v2613
        %v2615 = vpop.f32.mrb[0].mxu0
        %2616 = vdwg.mxu0
        %v2617 = vmul.f32 %v1972, %v1972
        %v2618 = vmul.f32 %v2617, 0.0625
        %v2619 = vsub.f32 %v2614, %v2618
        %v2620 = vmul.f32 %v2619, 0.06666667
        %v2621 = vmax.f32 %v2620, 1e-06
        %v2622 = vmin.f32 %v2621, 1000000.0
        %v2623 = vlog2.pop %v2622
        %v2624 = vmul.f32 %v2623, 0.6931472
        %2625 = vst.msk [vmem:[%s131] sm:$0xff] %vm883, %v2624
        %p2626 = scmp.lt.s32.totalorder %s15, 1
        %s2627 = scalar_select %p2626, %s15, 1
        %s2628 = smul.addr %s2627, 8
        %s2629 = scalar_lea.vmem %s1, %s2628
        // Predicated region
        $region29: #{tpu_custom_call.1} parent=23 // pred_check
          %p2630 = pneg %p59
        $region30: #{tpu_custom_call.1} parent=23 // pred_check_branch
          %2632 = sbr.rel (%p2630) target = $region32
        $region31: #{tpu_custom_call.1} parent=23 // pred_region
          _
        $region32: #{tpu_custom_call.1} parent=23 // pred_fallthru
          _
      $region24: #{tpu_custom_call.1} parent=5 // pred_fallthru
        _
      %p2633 = scmp.le.s32.totalorder 2, %s10
      // Predicated region
      $region33: #{tpu_custom_call.1} parent=5 // pred_check
        %p2634 = pneg %p2633
      $region34: #{tpu_custom_call.1} parent=5 // pred_check_branch
        %2636 = sbr.rel (%p2634) target = $region36
      $region35: #{tpu_custom_call.1} parent=5 // pred_region
        %s2637 = ssub.s32 %s10, 2
        // Predicated region
        $region37: #{tpu_custom_call.1} parent=35 // pred_check
          %p2638 = pneg %p65
        $region38: #{tpu_custom_call.1} parent=35 // pred_check_branch
          %2640 = sbr.rel (%p2638) target = $region40
        $region39: #{tpu_custom_call.1} parent=35 // pred_region
          %p2641 = scmp.lt.s32.totalorder %s16, 1
          %s2642 = scalar_select %p2641, %s16, 1
          %s2643 = smul.addr %s2642, 8
          %s2644 = scalar_lea.vmem %s1, %s2643
        $region40: #{tpu_custom_call.1} parent=35 // pred_fallthru
          _
      $region36: #{tpu_custom_call.1} parent=5 // pred_fallthru
        _
    $region6: #{tpu_custom_call.1} parent=1 // loop_footer
      %s14 = sadd.s32 1, %s10
    $region7: #{tpu_custom_call.1} parent=1 // loop_footer_branch
      %9 = sbr.rel target = $region3
    $region8: #{tpu_custom_call.1} parent=1 // loop_exit
      _
    %2645 = vsyncpa [#allocation3], 1
    %s2646 = scalar_lea.sflag [#allocation3], 1
    %2647 = vsyncpa %s2646, 1

</llo_original>
